<compile_context>
chip_gen: v7x
topology: tpu7x:2x2x1
jax: 0.10.0
libtpu: 0.0.40
codegen_flags: <defaults>
</compile_context>

<pallas_src>
import functools

import jax
import jax.numpy as jnp
from jax.experimental import pallas as pl
from jax.experimental.pallas import tpu as pltpu


# --------------------------------------------------------------------------
# Fused kernel: 3x (conv+BN+ReLU as im2col matmul) -> attention -> MLP
# --------------------------------------------------------------------------
def fused_attention_kernel(xq_ref, xk_ref, xv_ref,
                           wq_ref, bq_ref, wk_ref, bk_ref, wv_ref, bv_ref,
                           w1_ref, b1_ref, w2_ref, b2_ref, o_ref):
    # ---- conv(3x3,pad=1)+BN+ReLU projections (bf16 x bf16 -> f32 acc) ----
    # q already carries the attention scaling (folded into wq/bq).
    q = jnp.maximum(
        jnp.dot(wq_ref[...], xq_ref[0], preferred_element_type=jnp.float32)
        + bq_ref[...], 0.0)                                        # [T, D] f32
    k = jnp.maximum(
        jnp.dot(wk_ref[...], xk_ref[0], preferred_element_type=jnp.float32)
        + bk_ref[...], 0.0)                                        # [S, D] f32
    v = jnp.maximum(
        jnp.dot(wv_ref[...], xv_ref[0], preferred_element_type=jnp.float32)
        + bv_ref[...], 0.0)                                        # [S, D] f32

    # ---- scaled dot-product attention (scaling pre-folded into q) ----
    s = jax.lax.dot_general(q, k, (((1,), (1,)), ((), ())),
                            preferred_element_type=jnp.float32)    # [T, S]
    m = jnp.max(s, axis=-1, keepdims=True)
    e = jnp.exp(s - m)
    # EUP reciprocal instead of a VALU divide.
    p = e * pl.reciprocal(jnp.sum(e, axis=-1, keepdims=True), approx=True)
    # TODO(synk): dropout is an identity here (p=0.0 / eval mode) and is not implemented.
    a = jnp.dot(p, v, preferred_element_type=jnp.float32)          # [T, D]

    # ---- out_proj MLP: Linear -> ReLU -> Linear -> ReLU (bf16 ops, f32 acc) ----
    h = jnp.dot(a.astype(jnp.bfloat16), w1_ref[...],
                preferred_element_type=jnp.float32) + b1_ref[...]  # [T, 2D]
    h = jnp.maximum(h, 0.0)
    y = jnp.dot(h.astype(jnp.bfloat16), w2_ref[...],
                preferred_element_type=jnp.float32) + b2_ref[...]  # [T, D]
    o_ref[0] = jnp.maximum(y, 0.0).astype(o_ref.dtype)


# --------------------------------------------------------------------------
# Glue helpers (plain JAX)
# --------------------------------------------------------------------------
def _im2col(x):
    """x: [B, C, H, W] (NCHW) -> [B, C*9, H*W], tap flat index c*9 + dy*3 + dx."""
    B, C, H, W = x.shape
    xp = jnp.pad(x, ((0, 0), (0, 0), (1, 1), (1, 1)))
    patches = [xp[:, :, dy:dy + H, dx:dx + W]
               for dy in range(3) for dx in range(3)]
    return jnp.stack(patches, axis=2).reshape(B, C * 9, H * W)


def _fold_conv_bn(p, extra_scale=1.0, eps=1e-5):
    """Fold inference BatchNorm (and an optional positive scale) into conv w/b."""
    scale = p["gamma"] / jnp.sqrt(p["var"] + eps)
    w = p["w"] * scale[:, None, None, None] * extra_scale
    b = (p["beta"] + (p["b"] - p["mean"]) * scale) * extra_scale
    C = w.shape[0]
    return (w.reshape(C, -1).astype(jnp.bfloat16),
            b.reshape(C, 1).astype(jnp.float32))


# --------------------------------------------------------------------------
# Full forward pass (single fused pallas_call)
# --------------------------------------------------------------------------
@functools.partial(jax.jit, static_argnums=(4,))
def attention_forward(params, query, key_t, value, emb_dim_2d):
    B, T, E, _ = query.shape
    S = key_t.shape[1]
    D = E * E                      # H*W == emb_dim_2d**2
    scaling = float(emb_dim_2d) ** (-0.5)

    # Fold BN + attention scaling into conv weights; build im2col matrices.
    wq, bq = _fold_conv_bn(params["q_proj"], extra_scale=scaling)
    wk, bk = _fold_conv_bn(params["k_proj"])
    wv, bv = _fold_conv_bn(params["v_proj"])
    xq = _im2col(query).astype(jnp.bfloat16)    # [B, Cq*9, D]
    xk = _im2col(key_t).astype(jnp.bfloat16)    # [B, Ck*9, D]
    xv = _im2col(value).astype(jnp.bfloat16)    # [B, Ck*9, D]
    w1 = params["w1"].astype(jnp.bfloat16)      # [D, 2D]
    w2 = params["w2"].astype(jnp.bfloat16)      # [2D, D]
    b1 = params["b1"].astype(jnp.float32)       # [1, 2D]
    b2 = params["b2"].astype(jnp.float32)       # [1, D]

    Cq9 = wq.shape[1]
    Ck9 = wk.shape[1]

    out = pl.pallas_call(
        fused_attention_kernel,
        out_shape=jax.ShapeDtypeStruct((B, T, D), query.dtype),
        grid_spec=pltpu.PrefetchScalarGridSpec(
            num_scalar_prefetch=0,
            grid=(B,),
            in_specs=[
                # per-batch im2col activations
                pl.BlockSpec((1, Cq9, D), lambda b: (b, 0, 0)),
                pl.BlockSpec((1, Ck9, D), lambda b: (b, 0, 0)),
                pl.BlockSpec((1, Ck9, D), lambda b: (b, 0, 0)),
                # weights / biases: constant block index -> stay resident in VMEM
                pl.BlockSpec((T, Cq9), lambda b: (0, 0)),
                pl.BlockSpec((T, 1), lambda b: (0, 0)),
                pl.BlockSpec((S, Ck9), lambda b: (0, 0)),
                pl.BlockSpec((S, 1), lambda b: (0, 0)),
                pl.BlockSpec((S, Ck9), lambda b: (0, 0)),
                pl.BlockSpec((S, 1), lambda b: (0, 0)),
                pl.BlockSpec((D, 2 * D), lambda b: (0, 0)),
                pl.BlockSpec((1, 2 * D), lambda b: (0, 0)),
                pl.BlockSpec((2 * D, D), lambda b: (0, 0)),
                pl.BlockSpec((1, D), lambda b: (0, 0)),
            ],
            out_specs=pl.BlockSpec((1, T, D), lambda b: (b, 0, 0)),
        ),
        compiler_params=pltpu.CompilerParams(
            # batch axis independent -> v7x megacore gets one batch per TC
            dimension_semantics=("parallel",),
        ),
    )(xq, xk, xv, wq, bq, wk, bk, wv, bv, w1, b1, w2, b2)

    return out.reshape(B, T, E, E)


# --------------------------------------------------------------------------
# Deterministic parameter init (synthetic weights; shapes from __init__)
# --------------------------------------------------------------------------
def init_params(key, tgt_size, src_size, emb_dim_2d):
    D = emb_dim_2d * emb_dim_2d
    keys = jax.random.split(key, 7)

    def conv_bn_init(k, c):
        ks = jax.random.split(k, 6)
        return dict(
            w=jax.random.normal(ks[0], (c, c, 3, 3), jnp.float32) / jnp.sqrt(9.0 * c),
            b=0.05 * jax.random.normal(ks[1], (c,), jnp.float32),
            gamma=1.0 + 0.1 * jax.random.normal(ks[2], (c,), jnp.float32),
            beta=0.05 * jax.random.normal(ks[3], (c,), jnp.float32),
            mean=0.05 * jax.random.normal(ks[4], (c,), jnp.float32),
            var=1.0 + 0.1 * jax.random.uniform(ks[5], (c,), jnp.float32),
        )

    return dict(
        q_proj=conv_bn_init(keys[0], tgt_size),
        k_proj=conv_bn_init(keys[1], src_size),
        v_proj=conv_bn_init(keys[2], src_size),
        w1=jax.random.normal(keys[3], (D, 2 * D), jnp.float32) / jnp.sqrt(1.0 * D),
        b1=0.05 * jax.random.normal(keys[4], (1, 2 * D), jnp.float32),
        w2=jax.random.normal(keys[5], (2 * D, D), jnp.float32) / jnp.sqrt(2.0 * D),
        b2=0.05 * jax.random.normal(keys[6], (1, D), jnp.float32),
    )


# --------------------------------------------------------------------------
# Pure-JAX reference (for correctness check)
# --------------------------------------------------------------------------
def reference_forward(params, query, key_t, value, emb_dim_2d, eps=1e-5):
    def conv_bn_relu_ref(x, p):
        y = jax.lax.conv_general_dilated(
            x, p["w"], window_strides=(1, 1), padding=((1, 1), (1, 1)),
            dimension_numbers=("NCHW", "OIHW", "NCHW"))
        y = y + p["b"][None, :, None, None]
        y = (y - p["mean"][None, :, None, None]) * (
            p["gamma"] / jnp.sqrt(p["var"] + eps))[None, :, None, None]
        y = y + p["beta"][None, :, None, None]
        return jnp.maximum(y, 0.0)

    B, T, E, _ = query.shape
    S = key_t.shape[1]
    D = E * E
    q = conv_bn_relu_ref(query, params["q_proj"]).reshape(B, T, D)
    q = q * (float(emb_dim_2d) ** (-0.5))
    k = conv_bn_relu_ref(key_t, params["k_proj"]).reshape(B, S, D)
    v = conv_bn_relu_ref(value, params["v_proj"]).reshape(B, S, D)
    s = jnp.einsum("btd,bsd->bts", q, k)
    p = jax.nn.softmax(s, axis=-1)
    a = jnp.einsum("bts,bsd->btd", p, v)
    h = jnp.maximum(a.reshape(B * T, D) @ params["w1"] + params["b1"], 0.0)
    y = jnp.maximum(h @ params["w2"] + params["b2"], 0.0)
    return y.reshape(B, T, E, E)


if __name__ == "__main__":
    B, tgt_size, src_size, emb_dim_2d = 2, 4, 4, 16

    root = jax.random.PRNGKey(0)
    kq, kk, kv, kp = jax.random.split(root, 4)
    query = jax.random.normal(kq, (B, tgt_size, emb_dim_2d, emb_dim_2d), jnp.float32)
    key_t = jax.random.normal(kk, (B, src_size, emb_dim_2d, emb_dim_2d), jnp.float32)
    value = jax.random.normal(kv, (B, src_size, emb_dim_2d, emb_dim_2d), jnp.float32)
    params = init_params(kp, tgt_size, src_size, emb_dim_2d)

    out = attention_forward(params, query, key_t, value, emb_dim_2d)
    out = jax.block_until_ready(out)
    assert out.shape == (B, tgt_size, emb_dim_2d, emb_dim_2d)

    ref = reference_forward(params, query, key_t, value, emb_dim_2d)
    if not jnp.allclose(out, ref, atol=5e-2, rtol=5e-2):
        raise ValueError("Pallas output does not match JAX reference")

    print("KERNEL_OK")
</pallas_src>

<mosaic_0001>
module attributes {stable_mosaic.version = 11 : i64} {
  func.func @fused_attention_kernel(%arg0: i32, %arg1: memref<1x36x256xbf16, #tpu.memory_space<vmem>>, %arg2: memref<1x36x256xbf16, #tpu.memory_space<vmem>>, %arg3: memref<1x36x256xbf16, #tpu.memory_space<vmem>>, %arg4: memref<4x36xbf16, #tpu.memory_space<vmem>>, %arg5: memref<4x1xf32, #tpu.memory_space<vmem>>, %arg6: memref<4x36xbf16, #tpu.memory_space<vmem>>, %arg7: memref<4x1xf32, #tpu.memory_space<vmem>>, %arg8: memref<4x36xbf16, #tpu.memory_space<vmem>>, %arg9: memref<4x1xf32, #tpu.memory_space<vmem>>, %arg10: memref<256x512xbf16, #tpu.memory_space<vmem>>, %arg11: memref<1x512xf32, #tpu.memory_space<vmem>>, %arg12: memref<512x256xbf16, #tpu.memory_space<vmem>>, %arg13: memref<1x256xf32, #tpu.memory_space<vmem>>, %arg14: memref<1x4x256xf32, #tpu.memory_space<vmem>>) attributes {dimension_semantics = [#tpu.dimension_semantics<parallel>], iteration_bounds = array<i64: 2>, scalar_prefetch = 0 : i64, scratch_operands = 0 : i64, tpu.core_type = #tpu.core_type<tc>, window_params = [{transform_indices = @transform_0, window_bounds = array<i64: 1, 36, 256>}, {transform_indices = @transform_1, window_bounds = array<i64: 1, 36, 256>}, {transform_indices = @transform_2, window_bounds = array<i64: 1, 36, 256>}, {pipeline_mode = #tpu.pipeline_mode<synchronous>, transform_indices = @transform_3, window_bounds = array<i64: 4, 36>}, {pipeline_mode = #tpu.pipeline_mode<synchronous>, transform_indices = @transform_4, window_bounds = array<i64: 4, 1>}, {pipeline_mode = #tpu.pipeline_mode<synchronous>, transform_indices = @transform_5, window_bounds = array<i64: 4, 36>}, {pipeline_mode = #tpu.pipeline_mode<synchronous>, transform_indices = @transform_6, window_bounds = array<i64: 4, 1>}, {pipeline_mode = #tpu.pipeline_mode<synchronous>, transform_indices = @transform_7, window_bounds = array<i64: 4, 36>}, {pipeline_mode = #tpu.pipeline_mode<synchronous>, transform_indices = @transform_8, window_bounds = array<i64: 4, 1>}, {pipeline_mode = #tpu.pipeline_mode<synchronous>, transform_indices = @transform_9, window_bounds = array<i64: 256, 512>}, {pipeline_mode = #tpu.pipeline_mode<synchronous>, transform_indices = @transform_10, window_bounds = array<i64: 1, 512>}, {pipeline_mode = #tpu.pipeline_mode<synchronous>, transform_indices = @transform_11, window_bounds = array<i64: 512, 256>}, {pipeline_mode = #tpu.pipeline_mode<synchronous>, transform_indices = @transform_12, window_bounds = array<i64: 1, 256>}, {transform_indices = @transform_13, window_bounds = array<i64: 1, 4, 256>}]} {
    %c0 = arith.constant 0 : index
    %c0_0 = arith.constant 0 : index
    %0 = vector.load %arg4[%c0, %c0_0] : memref<4x36xbf16, #tpu.memory_space<vmem>>, vector<4x36xbf16>
    %c0_1 = arith.constant 0 : index
    %c0_2 = arith.constant 0 : index
    %c0_3 = arith.constant 0 : index
    %1 = vector.load %arg1[%c0_1, %c0_2, %c0_3] : memref<1x36x256xbf16, #tpu.memory_space<vmem>>, vector<1x36x256xbf16>
    %2 = vector.shape_cast %1 : vector<1x36x256xbf16> to vector<36x256xbf16>
    %cst = arith.constant dense<0.000000e+00> : vector<4x256xf32>
    %3 = tpu.matmul %0, %2, %cst {dimension_numbers = #tpu.dot_dimension_numbers<[1], [0], [0], [1], [0, 0, 1, 1], [], []>} : vector<4x36xbf16>, vector<36x256xbf16>, vector<4x256xf32> -> vector<4x256xf32>
    %c0_4 = arith.constant 0 : index
    %c0_5 = arith.constant 0 : index
    %4 = vector.load %arg5[%c0_4, %c0_5] : memref<4x1xf32, #tpu.memory_space<vmem>>, vector<4x1xf32>
    %5 = vector.broadcast %4 : vector<4x1xf32> to vector<4x256xf32>
    %6 = arith.addf %3, %5 : vector<4x256xf32>
    %cst_6 = arith.constant 0.000000e+00 : f32
    %7 = vector.broadcast %cst_6 : f32 to vector<4x256xf32>
    %8 = arith.maximumf %6, %7 : vector<4x256xf32>
    %c0_7 = arith.constant 0 : index
    %c0_8 = arith.constant 0 : index
    %9 = vector.load %arg6[%c0_7, %c0_8] : memref<4x36xbf16, #tpu.memory_space<vmem>>, vector<4x36xbf16>
    %c0_9 = arith.constant 0 : index
    %c0_10 = arith.constant 0 : index
    %c0_11 = arith.constant 0 : index
    %10 = vector.load %arg2[%c0_9, %c0_10, %c0_11] : memref<1x36x256xbf16, #tpu.memory_space<vmem>>, vector<1x36x256xbf16>
    %11 = vector.shape_cast %10 : vector<1x36x256xbf16> to vector<36x256xbf16>
    %cst_12 = arith.constant dense<0.000000e+00> : vector<4x256xf32>
    %12 = tpu.matmul %9, %11, %cst_12 {dimension_numbers = #tpu.dot_dimension_numbers<[1], [0], [0], [1], [0, 0, 1, 1], [], []>} : vector<4x36xbf16>, vector<36x256xbf16>, vector<4x256xf32> -> vector<4x256xf32>
    %c0_13 = arith.constant 0 : index
    %c0_14 = arith.constant 0 : index
    %13 = vector.load %arg7[%c0_13, %c0_14] : memref<4x1xf32, #tpu.memory_space<vmem>>, vector<4x1xf32>
    %14 = vector.broadcast %13 : vector<4x1xf32> to vector<4x256xf32>
    %15 = arith.addf %12, %14 : vector<4x256xf32>
    %cst_15 = arith.constant 0.000000e+00 : f32
    %16 = vector.broadcast %cst_15 : f32 to vector<4x256xf32>
    %17 = arith.maximumf %15, %16 : vector<4x256xf32>
    %c0_16 = arith.constant 0 : index
    %c0_17 = arith.constant 0 : index
    %18 = vector.load %arg8[%c0_16, %c0_17] : memref<4x36xbf16, #tpu.memory_space<vmem>>, vector<4x36xbf16>
    %c0_18 = arith.constant 0 : index
    %c0_19 = arith.constant 0 : index
    %c0_20 = arith.constant 0 : index
    %19 = vector.load %arg3[%c0_18, %c0_19, %c0_20] : memref<1x36x256xbf16, #tpu.memory_space<vmem>>, vector<1x36x256xbf16>
    %20 = vector.shape_cast %19 : vector<1x36x256xbf16> to vector<36x256xbf16>
    %cst_21 = arith.constant dense<0.000000e+00> : vector<4x256xf32>
    %21 = tpu.matmul %18, %20, %cst_21 {dimension_numbers = #tpu.dot_dimension_numbers<[1], [0], [0], [1], [0, 0, 1, 1], [], []>} : vector<4x36xbf16>, vector<36x256xbf16>, vector<4x256xf32> -> vector<4x256xf32>
    %c0_22 = arith.constant 0 : index
    %c0_23 = arith.constant 0 : index
    %22 = vector.load %arg9[%c0_22, %c0_23] : memref<4x1xf32, #tpu.memory_space<vmem>>, vector<4x1xf32>
    %23 = vector.broadcast %22 : vector<4x1xf32> to vector<4x256xf32>
    %24 = arith.addf %21, %23 : vector<4x256xf32>
    %cst_24 = arith.constant 0.000000e+00 : f32
    %25 = vector.broadcast %cst_24 : f32 to vector<4x256xf32>
    %26 = arith.maximumf %24, %25 : vector<4x256xf32>
    %cst_25 = arith.constant dense<0.000000e+00> : vector<4x4xf32>
    %27 = tpu.matmul %8, %17, %cst_25 {dimension_numbers = #tpu.dot_dimension_numbers<[1], [1], [0], [0], [0, 0, 1, 0], [], []>} : vector<4x256xf32>, vector<4x256xf32>, vector<4x4xf32> -> vector<4x4xf32>
    %cst_26 = arith.constant dense<0xFF800000> : vector<4xf32>
    %28 = vector.multi_reduction <maximumf>, %27, %cst_26 [1] : vector<4x4xf32> to vector<4xf32>
    %29 = vector.shape_cast %28 : vector<4xf32> to vector<4x1xf32>
    %30 = vector.broadcast %29 : vector<4x1xf32> to vector<4x4xf32>
    %31 = arith.subf %27, %30 : vector<4x4xf32>
    %32 = math.exp %31 : vector<4x4xf32>
    %cst_27 = arith.constant dense<0.000000e+00> : vector<4xf32>
    %33 = vector.multi_reduction <add>, %32, %cst_27 [1] : vector<4x4xf32> to vector<4xf32>
    %34 = vector.shape_cast %33 : vector<4xf32> to vector<4x1xf32>
    %35 = tpu.reciprocal %34 {approx = true} : vector<4x1xf32> -> vector<4x1xf32>
    %36 = vector.broadcast %35 : vector<4x1xf32> to vector<4x4xf32>
    %37 = arith.mulf %32, %36 : vector<4x4xf32>
    %cst_28 = arith.constant dense<0.000000e+00> : vector<4x256xf32>
    %38 = tpu.matmul %37, %26, %cst_28 {dimension_numbers = #tpu.dot_dimension_numbers<[1], [0], [0], [1], [0, 0, 1, 1], [], []>} : vector<4x4xf32>, vector<4x256xf32>, vector<4x256xf32> -> vector<4x256xf32>
    %39 = arith.truncf %38 : vector<4x256xf32> to vector<4x256xbf16>
    %c0_29 = arith.constant 0 : index
    %c0_30 = arith.constant 0 : index
    %40 = vector.load %arg10[%c0_29, %c0_30] : memref<256x512xbf16, #tpu.memory_space<vmem>>, vector<256x512xbf16>
    %cst_31 = arith.constant dense<0.000000e+00> : vector<4x512xf32>
    %41 = tpu.matmul %39, %40, %cst_31 {dimension_numbers = #tpu.dot_dimension_numbers<[1], [0], [0], [1], [0, 0, 1, 1], [], []>} : vector<4x256xbf16>, vector<256x512xbf16>, vector<4x512xf32> -> vector<4x512xf32>
    %c0_32 = arith.constant 0 : index
    %c0_33 = arith.constant 0 : index
    %42 = vector.load %arg11[%c0_32, %c0_33] : memref<1x512xf32, #tpu.memory_space<vmem>>, vector<1x512xf32>
    %43 = vector.broadcast %42 : vector<1x512xf32> to vector<4x512xf32>
    %44 = arith.addf %41, %43 : vector<4x512xf32>
    %cst_34 = arith.constant 0.000000e+00 : f32
    %45 = vector.broadcast %cst_34 : f32 to vector<4x512xf32>
    %46 = arith.maximumf %44, %45 : vector<4x512xf32>
    %47 = arith.truncf %46 : vector<4x512xf32> to vector<4x512xbf16>
    %c0_35 = arith.constant 0 : index
    %c0_36 = arith.constant 0 : index
    %48 = vector.load %arg12[%c0_35, %c0_36] : memref<512x256xbf16, #tpu.memory_space<vmem>>, vector<512x256xbf16>
    %cst_37 = arith.constant dense<0.000000e+00> : vector<4x256xf32>
    %49 = tpu.matmul %47, %48, %cst_37 {dimension_numbers = #tpu.dot_dimension_numbers<[1], [0], [0], [1], [0, 0, 1, 1], [], []>} : vector<4x512xbf16>, vector<512x256xbf16>, vector<4x256xf32> -> vector<4x256xf32>
    %c0_38 = arith.constant 0 : index
    %c0_39 = arith.constant 0 : index
    %50 = vector.load %arg13[%c0_38, %c0_39] : memref<1x256xf32, #tpu.memory_space<vmem>>, vector<1x256xf32>
    %51 = vector.broadcast %50 : vector<1x256xf32> to vector<4x256xf32>
    %52 = arith.addf %49, %51 : vector<4x256xf32>
    %cst_40 = arith.constant 0.000000e+00 : f32
    %53 = vector.broadcast %cst_40 : f32 to vector<4x256xf32>
    %54 = arith.maximumf %52, %53 : vector<4x256xf32>
    %c0_41 = arith.constant 0 : index
    %c0_42 = arith.constant 0 : index
    %c0_43 = arith.constant 0 : index
    %55 = vector.load %arg14[%c0_41, %c0_42, %c0_43] : memref<1x4x256xf32, #tpu.memory_space<vmem>>, vector<1x4x256xf32>
    %56 = vector.shape_cast %55 : vector<1x4x256xf32> to vector<4x256xf32>
    %57 = vector.shape_cast %54 : vector<4x256xf32> to vector<1x4x256xf32>
    tpu.vector_store %arg14[%c0_41, %c0_42, %c0_43], %57 {strides = array<i32>} : memref<1x4x256xf32, #tpu.memory_space<vmem>>, vector<1x4x256xf32>,
    return
  }
  func.func @transform_0(%arg0: i32) -> (i32, i32, i32) {
    %c0_i32 = arith.constant 0 : i32
    %c0_i32_0 = arith.constant 0 : i32
    %c0_i32_1 = arith.constant 0 : i32
    return %arg0, %c0_i32, %c0_i32_0 : i32, i32, i32
  }
  func.func @transform_1(%arg0: i32) -> (i32, i32, i32) {
    %c0_i32 = arith.constant 0 : i32
    %c0_i32_0 = arith.constant 0 : i32
    %c0_i32_1 = arith.constant 0 : i32
    return %arg0, %c0_i32, %c0_i32_0 : i32, i32, i32
  }
  func.func @transform_2(%arg0: i32) -> (i32, i32, i32) {
    %c0_i32 = arith.constant 0 : i32
    %c0_i32_0 = arith.constant 0 : i32
    %c0_i32_1 = arith.constant 0 : i32
    return %arg0, %c0_i32, %c0_i32_0 : i32, i32, i32
  }
  func.func @transform_3(%arg0: i32) -> (i32, i32) {
    %c0_i32 = arith.constant 0 : i32
    %c0_i32_0 = arith.constant 0 : i32
    %c0_i32_1 = arith.constant 0 : i32
    return %c0_i32, %c0_i32_0 : i32, i32
  }
  func.func @transform_4(%arg0: i32) -> (i32, i32) {
    %c0_i32 = arith.constant 0 : i32
    %c0_i32_0 = arith.constant 0 : i32
    %c0_i32_1 = arith.constant 0 : i32
    return %c0_i32, %c0_i32_0 : i32, i32
  }
  func.func @transform_5(%arg0: i32) -> (i32, i32) {
    %c0_i32 = arith.constant 0 : i32
    %c0_i32_0 = arith.constant 0 : i32
    %c0_i32_1 = arith.constant 0 : i32
    return %c0_i32, %c0_i32_0 : i32, i32
  }
  func.func @transform_6(%arg0: i32) -> (i32, i32) {
    %c0_i32 = arith.constant 0 : i32
    %c0_i32_0 = arith.constant 0 : i32
    %c0_i32_1 = arith.constant 0 : i32
    return %c0_i32, %c0_i32_0 : i32, i32
  }
  func.func @transform_7(%arg0: i32) -> (i32, i32) {
    %c0_i32 = arith.constant 0 : i32
    %c0_i32_0 = arith.constant 0 : i32
    %c0_i32_1 = arith.constant 0 : i32
    return %c0_i32, %c0_i32_0 : i32, i32
  }
  func.func @transform_8(%arg0: i32) -> (i32, i32) {
    %c0_i32 = arith.constant 0 : i32
    %c0_i32_0 = arith.constant 0 : i32
    %c0_i32_1 = arith.constant 0 : i32
    return %c0_i32, %c0_i32_0 : i32, i32
  }
  func.func @transform_9(%arg0: i32) -> (i32, i32) {
    %c0_i32 = arith.constant 0 : i32
    %c0_i32_0 = arith.constant 0 : i32
    %c0_i32_1 = arith.constant 0 : i32
    return %c0_i32, %c0_i32_0 : i32, i32
  }
  func.func @transform_10(%arg0: i32) -> (i32, i32) {
    %c0_i32 = arith.constant 0 : i32
    %c0_i32_0 = arith.constant 0 : i32
    %c0_i32_1 = arith.constant 0 : i32
    return %c0_i32, %c0_i32_0 : i32, i32
  }
  func.func @transform_11(%arg0: i32) -> (i32, i32) {
    %c0_i32 = arith.constant 0 : i32
    %c0_i32_0 = arith.constant 0 : i32
    %c0_i32_1 = arith.constant 0 : i32
    return %c0_i32, %c0_i32_0 : i32, i32
  }
  func.func @transform_12(%arg0: i32) -> (i32, i32) {
    %c0_i32 = arith.constant 0 : i32
    %c0_i32_0 = arith.constant 0 : i32
    %c0_i32_1 = arith.constant 0 : i32
    return %c0_i32, %c0_i32_0 : i32, i32
  }
  func.func @transform_13(%arg0: i32) -> (i32, i32, i32) {
    %c0_i32 = arith.constant 0 : i32
    %c0_i32_0 = arith.constant 0 : i32
    %c0_i32_1 = arith.constant 0 : i32
    return %arg0, %c0_i32, %c0_i32_0 : i32, i32, i32
  }
}

</mosaic_0001>

<llo_original>
// kernel: attention_forward.1
$region0: #{attention_forward.1}
  #allocation0 [shape = 'u32[]', space=smem, size = 0x4, offset = 0x4, fixed_abs, tag = 'smem constant byte address 0x4 - core index']
  #allocation1 [shape = 'u32[144,128]{1,0:T(1,128)}', space=vmem, size = 0x12000, scoped, tag = 'internal scratch']
  %s0 = inlined_call_operand.vmem [shape: bf16[2,36,256], index: 0, kind: input, shape index: {}]
  %s1 = inlined_call_operand.vmem [shape: bf16[2,36,256], index: 1, kind: input, shape index: {}]
  %s2 = inlined_call_operand.vmem [shape: bf16[2,36,256], index: 2, kind: input, shape index: {}]
  %s3 = inlined_call_operand.vmem [shape: bf16[4,36], index: 3, kind: input, shape index: {}]
  %s4 = inlined_call_operand.vmem [shape: f32[4,1], index: 4, kind: input, shape index: {}]
  %s5 = inlined_call_operand.vmem [shape: bf16[4,36], index: 5, kind: input, shape index: {}]
  %s6 = inlined_call_operand.vmem [shape: f32[4,1], index: 6, kind: input, shape index: {}]
  %s7 = inlined_call_operand.vmem [shape: bf16[4,36], index: 7, kind: input, shape index: {}]
  %s8 = inlined_call_operand.vmem [shape: f32[4,1], index: 8, kind: input, shape index: {}]
  %s9 = inlined_call_operand.vmem [shape: bf16[256,512], index: 9, kind: input, shape index: {}]
  %s10 = inlined_call_operand.vmem [shape: f32[1,512], index: 10, kind: input, shape index: {}]
  %s11 = inlined_call_operand.vmem [shape: bf16[512,256], index: 11, kind: input, shape index: {}]
  %s12 = inlined_call_operand.vmem [shape: f32[1,256], index: 12, kind: input, shape index: {}]
  %s13 = inlined_call_operand.vmem [shape: f32[2,4,256], index: 13, kind: output, shape index: {}]
  %s14 = sld [smem:[#allocation0]]
  $region85: #{attention_forward.1} parent=0
    _
  %s16 = ssub.s32 1, %s14
  %s17 = scalar_select 0, %s16, %s14
  loop: start=0, step=1, limit=4
  $region2: #{attention_forward.1} parent=0 // loop_pre_header
    _
  $region3: #{attention_forward.1} parent=0 // loop_header
    %s19 = sphi 0, %s23
    %p20 = scmp.ge.s32.totalorder %s19, 4
    %s29 = sphi 0, %s31
    %s32 = sphi 0, %s29
    %s33 = sphi 0, %s32
    %s49 = sphi 0, %s33
    %s55 = sphi 0, %s57
    %s58 = sphi 0, %s55
    %s59 = sphi 0, %s58
    %s75 = sphi 0, %s59
    %s81 = sphi 0, %s83
    %s84 = sphi 0, %s81
    %s85 = sphi 0, %s84
    %s101 = sphi 0, %s85
    %s105 = sphi 0, %s105
    %s107 = sphi 0, %s105
    %s108 = sphi 0, %s107
    %s122 = sphi 0, %s108
    %s126 = sphi 0, %s126
    %s128 = sphi 0, %s126
    %s129 = sphi 0, %s128
    %s143 = sphi 0, %s129
    %s147 = sphi 0, %s147
    %s149 = sphi 0, %s147
    %s150 = sphi 0, %s149
    %s164 = sphi 0, %s150
    %s168 = sphi 0, %s168
    %s170 = sphi 0, %s168
    %s171 = sphi 0, %s170
    %s185 = sphi 0, %s171
    %s189 = sphi 0, %s189
    %s191 = sphi 0, %s189
    %s192 = sphi 0, %s191
    %s206 = sphi 0, %s192
    %s210 = sphi 0, %s210
    %s212 = sphi 0, %s210
    %s213 = sphi 0, %s212
    %s227 = sphi 0, %s213
    %s231 = sphi 0, %s231
    %s233 = sphi 0, %s231
    %s234 = sphi 0, %s233
    %s248 = sphi 0, %s234
    %s252 = sphi 0, %s252
    %s254 = sphi 0, %s252
    %s255 = sphi 0, %s254
    %s269 = sphi 0, %s255
    %s273 = sphi 0, %s273
    %s275 = sphi 0, %s273
    %s276 = sphi 0, %s275
    %s290 = sphi 0, %s276
    %s294 = sphi 0, %s294
    %s296 = sphi 0, %s294
    %s297 = sphi 0, %s296
    %s311 = sphi 0, %s297
    %s317 = sphi 0, %s319
    %s320 = sphi 0, %s317
    %s321 = sphi 0, %s320
    %s337 = sphi 0, %s321
  $region4: #{attention_forward.1} parent=0 // loop_header_branch
    %22 = sbr.rel (%p20) target = $region8
  $region5: #{attention_forward.1} parent=0 // loop_body
    %s24 = ssub.s32 %s19, 1
    %s25 = ssub.s32 %s19, 2
    %s26 = sadd.s32 %s19, 1
    %s27 = ssub.s32 %s19, %s26
    %p28 = scmp.eq.s32.totalorder %s27, 0
    %s30 = sadd.s32 %s29, 1
    %s31 = scalar_select %p28, %s29, %s30
    %p34 = pneg %p28
    %p35 = scmp.eq.s32.totalorder %s19, 1
    %p36 = por %p34, %p35
    %p37 = scmp.ne.s32.totalorder %s29, %s32
    %p38 = scmp.eq.s32.totalorder %s19, 0
    %p39 = por %p37, %p38
    %p40 = scmp.ne.s32.totalorder %s29, %s32
    %p41 = scmp.eq.s32.totalorder %s24, 1
    %p42 = por %p40, %p41
    %p43 = scmp.ne.s32.totalorder %s32, %s33
    %p44 = scmp.eq.s32.totalorder %s24, 0
    %p45 = por %p43, %p44
    %p46 = scmp.ne.s32.totalorder %s32, %s33
    %p47 = scmp.eq.s32.totalorder %s25, 1
    %p48 = por %p46, %p47
    %p50 = scmp.ne.s32.totalorder %s33, %s49
    %p51 = scmp.eq.s32.totalorder %s25, 0
    %p52 = por %p50, %p51
    %s53 = ssub.s32 %s19, %s26
    %p54 = scmp.eq.s32.totalorder %s53, 0
    %s56 = sadd.s32 %s55, 1
    %s57 = scalar_select %p54, %s55, %s56
    %p60 = pneg %p54
    %p61 = scmp.eq.s32.totalorder %s19, 1
    %p62 = por %p60, %p61
    %p63 = scmp.ne.s32.totalorder %s55, %s58
    %p64 = scmp.eq.s32.totalorder %s19, 0
    %p65 = por %p63, %p64
    %p66 = scmp.ne.s32.totalorder %s55, %s58
    %p67 = scmp.eq.s32.totalorder %s24, 1
    %p68 = por %p66, %p67
    %p69 = scmp.ne.s32.totalorder %s58, %s59
    %p70 = scmp.eq.s32.totalorder %s24, 0
    %p71 = por %p69, %p70
    %p72 = scmp.ne.s32.totalorder %s58, %s59
    %p73 = scmp.eq.s32.totalorder %s25, 1
    %p74 = por %p72, %p73
    %p76 = scmp.ne.s32.totalorder %s59, %s75
    %p77 = scmp.eq.s32.totalorder %s25, 0
    %p78 = por %p76, %p77
    %s79 = ssub.s32 %s19, %s26
    %p80 = scmp.eq.s32.totalorder %s79, 0
    %s82 = sadd.s32 %s81, 1
    %s83 = scalar_select %p80, %s81, %s82
    %p86 = pneg %p80
    %p87 = scmp.eq.s32.totalorder %s19, 1
    %p88 = por %p86, %p87
    %p89 = scmp.ne.s32.totalorder %s81, %s84
    %p90 = scmp.eq.s32.totalorder %s19, 0
    %p91 = por %p89, %p90
    %p92 = scmp.ne.s32.totalorder %s81, %s84
    %p93 = scmp.eq.s32.totalorder %s24, 1
    %p94 = por %p92, %p93
    %p95 = scmp.ne.s32.totalorder %s84, %s85
    %p96 = scmp.eq.s32.totalorder %s24, 0
    %p97 = por %p95, %p96
    %p98 = scmp.ne.s32.totalorder %s84, %s85
    %p99 = scmp.eq.s32.totalorder %s25, 1
    %p100 = por %p98, %p99
    %p102 = scmp.ne.s32.totalorder %s85, %s101
    %p103 = scmp.eq.s32.totalorder %s25, 0
    %p104 = por %p102, %p103
    %s106 = sadd.s32 %s105, 1
    %p109 = scmp.eq.s32.totalorder %s19, 1
    %p110 = scmp.ne.s32.totalorder %s105, %s107
    %p111 = scmp.eq.s32.totalorder %s19, 0
    %p112 = por %p110, %p111
    %p113 = scmp.ne.s32.totalorder %s105, %s107
    %p114 = scmp.eq.s32.totalorder %s24, 1
    %p115 = por %p113, %p114
    %p116 = scmp.ne.s32.totalorder %s107, %s108
    %p117 = scmp.eq.s32.totalorder %s24, 0
    %p118 = por %p116, %p117
    %p119 = scmp.ne.s32.totalorder %s107, %s108
    %p120 = scmp.eq.s32.totalorder %s25, 1
    %p121 = por %p119, %p120
    %p123 = scmp.ne.s32.totalorder %s108, %s122
    %p124 = scmp.eq.s32.totalorder %s25, 0
    %p125 = por %p123, %p124
    %s127 = sadd.s32 %s126, 1
    %p130 = scmp.eq.s32.totalorder %s19, 1
    %p131 = scmp.ne.s32.totalorder %s126, %s128
    %p132 = scmp.eq.s32.totalorder %s19, 0
    %p133 = por %p131, %p132
    %p134 = scmp.ne.s32.totalorder %s126, %s128
    %p135 = scmp.eq.s32.totalorder %s24, 1
    %p136 = por %p134, %p135
    %p137 = scmp.ne.s32.totalorder %s128, %s129
    %p138 = scmp.eq.s32.totalorder %s24, 0
    %p139 = por %p137, %p138
    %p140 = scmp.ne.s32.totalorder %s128, %s129
    %p141 = scmp.eq.s32.totalorder %s25, 1
    %p142 = por %p140, %p141
    %p144 = scmp.ne.s32.totalorder %s129, %s143
    %p145 = scmp.eq.s32.totalorder %s25, 0
    %p146 = por %p144, %p145
    %s148 = sadd.s32 %s147, 1
    %p151 = scmp.eq.s32.totalorder %s19, 1
    %p152 = scmp.ne.s32.totalorder %s147, %s149
    %p153 = scmp.eq.s32.totalorder %s19, 0
    %p154 = por %p152, %p153
    %p155 = scmp.ne.s32.totalorder %s147, %s149
    %p156 = scmp.eq.s32.totalorder %s24, 1
    %p157 = por %p155, %p156
    %p158 = scmp.ne.s32.totalorder %s149, %s150
    %p159 = scmp.eq.s32.totalorder %s24, 0
    %p160 = por %p158, %p159
    %p161 = scmp.ne.s32.totalorder %s149, %s150
    %p162 = scmp.eq.s32.totalorder %s25, 1
    %p163 = por %p161, %p162
    %p165 = scmp.ne.s32.totalorder %s150, %s164
    %p166 = scmp.eq.s32.totalorder %s25, 0
    %p167 = por %p165, %p166
    %s169 = sadd.s32 %s168, 1
    %p172 = scmp.eq.s32.totalorder %s19, 1
    %p173 = scmp.ne.s32.totalorder %s168, %s170
    %p174 = scmp.eq.s32.totalorder %s19, 0
    %p175 = por %p173, %p174
    %p176 = scmp.ne.s32.totalorder %s168, %s170
    %p177 = scmp.eq.s32.totalorder %s24, 1
    %p178 = por %p176, %p177
    %p179 = scmp.ne.s32.totalorder %s170, %s171
    %p180 = scmp.eq.s32.totalorder %s24, 0
    %p181 = por %p179, %p180
    %p182 = scmp.ne.s32.totalorder %s170, %s171
    %p183 = scmp.eq.s32.totalorder %s25, 1
    %p184 = por %p182, %p183
    %p186 = scmp.ne.s32.totalorder %s171, %s185
    %p187 = scmp.eq.s32.totalorder %s25, 0
    %p188 = por %p186, %p187
    %s190 = sadd.s32 %s189, 1
    %p193 = scmp.eq.s32.totalorder %s19, 1
    %p194 = scmp.ne.s32.totalorder %s189, %s191
    %p195 = scmp.eq.s32.totalorder %s19, 0
    %p196 = por %p194, %p195
    %p197 = scmp.ne.s32.totalorder %s189, %s191
    %p198 = scmp.eq.s32.totalorder %s24, 1
    %p199 = por %p197, %p198
    %p200 = scmp.ne.s32.totalorder %s191, %s192
    %p201 = scmp.eq.s32.totalorder %s24, 0
    %p202 = por %p200, %p201
    %p203 = scmp.ne.s32.totalorder %s191, %s192
    %p204 = scmp.eq.s32.totalorder %s25, 1
    %p205 = por %p203, %p204
    %p207 = scmp.ne.s32.totalorder %s192, %s206
    %p208 = scmp.eq.s32.totalorder %s25, 0
    %p209 = por %p207, %p208
    %s211 = sadd.s32 %s210, 1
    %p214 = scmp.eq.s32.totalorder %s19, 1
    %p215 = scmp.ne.s32.totalorder %s210, %s212
    %p216 = scmp.eq.s32.totalorder %s19, 0
    %p217 = por %p215, %p216
    %p218 = scmp.ne.s32.totalorder %s210, %s212
    %p219 = scmp.eq.s32.totalorder %s24, 1
    %p220 = por %p218, %p219
    %p221 = scmp.ne.s32.totalorder %s212, %s213
    %p222 = scmp.eq.s32.totalorder %s24, 0
    %p223 = por %p221, %p222
    %p224 = scmp.ne.s32.totalorder %s212, %s213
    %p225 = scmp.eq.s32.totalorder %s25, 1
    %p226 = por %p224, %p225
    %p228 = scmp.ne.s32.totalorder %s213, %s227
    %p229 = scmp.eq.s32.totalorder %s25, 0
    %p230 = por %p228, %p229
    %s232 = sadd.s32 %s231, 1
    %p235 = scmp.eq.s32.totalorder %s19, 1
    %p236 = scmp.ne.s32.totalorder %s231, %s233
    %p237 = scmp.eq.s32.totalorder %s19, 0
    %p238 = por %p236, %p237
    %p239 = scmp.ne.s32.totalorder %s231, %s233
    %p240 = scmp.eq.s32.totalorder %s24, 1
    %p241 = por %p239, %p240
    %p242 = scmp.ne.s32.totalorder %s233, %s234
    %p243 = scmp.eq.s32.totalorder %s24, 0
    %p244 = por %p242, %p243
    %p245 = scmp.ne.s32.totalorder %s233, %s234
    %p246 = scmp.eq.s32.totalorder %s25, 1
    %p247 = por %p245, %p246
    %p249 = scmp.ne.s32.totalorder %s234, %s248
    %p250 = scmp.eq.s32.totalorder %s25, 0
    %p251 = por %p249, %p250
    %s253 = sadd.s32 %s252, 1
    %p256 = scmp.eq.s32.totalorder %s19, 1
    %p257 = scmp.ne.s32.totalorder %s252, %s254
    %p258 = scmp.eq.s32.totalorder %s19, 0
    %p259 = por %p257, %p258
    %p260 = scmp.ne.s32.totalorder %s252, %s254
    %p261 = scmp.eq.s32.totalorder %s24, 1
    %p262 = por %p260, %p261
    %p263 = scmp.ne.s32.totalorder %s254, %s255
    %p264 = scmp.eq.s32.totalorder %s24, 0
    %p265 = por %p263, %p264
    %p266 = scmp.ne.s32.totalorder %s254, %s255
    %p267 = scmp.eq.s32.totalorder %s25, 1
    %p268 = por %p266, %p267
    %p270 = scmp.ne.s32.totalorder %s255, %s269
    %p271 = scmp.eq.s32.totalorder %s25, 0
    %p272 = por %p270, %p271
    %s274 = sadd.s32 %s273, 1
    %p277 = scmp.eq.s32.totalorder %s19, 1
    %p278 = scmp.ne.s32.totalorder %s273, %s275
    %p279 = scmp.eq.s32.totalorder %s19, 0
    %p280 = por %p278, %p279
    %p281 = scmp.ne.s32.totalorder %s273, %s275
    %p282 = scmp.eq.s32.totalorder %s24, 1
    %p283 = por %p281, %p282
    %p284 = scmp.ne.s32.totalorder %s275, %s276
    %p285 = scmp.eq.s32.totalorder %s24, 0
    %p286 = por %p284, %p285
    %p287 = scmp.ne.s32.totalorder %s275, %s276
    %p288 = scmp.eq.s32.totalorder %s25, 1
    %p289 = por %p287, %p288
    %p291 = scmp.ne.s32.totalorder %s276, %s290
    %p292 = scmp.eq.s32.totalorder %s25, 0
    %p293 = por %p291, %p292
    %s295 = sadd.s32 %s294, 1
    %p298 = scmp.eq.s32.totalorder %s19, 1
    %p299 = scmp.ne.s32.totalorder %s294, %s296
    %p300 = scmp.eq.s32.totalorder %s19, 0
    %p301 = por %p299, %p300
    %p302 = scmp.ne.s32.totalorder %s294, %s296
    %p303 = scmp.eq.s32.totalorder %s24, 1
    %p304 = por %p302, %p303
    %p305 = scmp.ne.s32.totalorder %s296, %s297
    %p306 = scmp.eq.s32.totalorder %s24, 0
    %p307 = por %p305, %p306
    %p308 = scmp.ne.s32.totalorder %s296, %s297
    %p309 = scmp.eq.s32.totalorder %s25, 1
    %p310 = por %p308, %p309
    %p312 = scmp.ne.s32.totalorder %s297, %s311
    %p313 = scmp.eq.s32.totalorder %s25, 0
    %p314 = por %p312, %p313
    %s315 = ssub.s32 %s19, %s26
    %p316 = scmp.eq.s32.totalorder %s315, 0
    %s318 = sadd.s32 %s317, 1
    %s319 = scalar_select %p316, %s317, %s318
    %p322 = pneg %p316
    %p323 = scmp.eq.s32.totalorder %s19, 1
    %p324 = por %p322, %p323
    %p325 = scmp.ne.s32.totalorder %s317, %s320
    %p326 = scmp.eq.s32.totalorder %s19, 0
    %p327 = por %p325, %p326
    %p328 = scmp.ne.s32.totalorder %s317, %s320
    %p329 = scmp.eq.s32.totalorder %s24, 1
    %p330 = por %p328, %p329
    %p331 = scmp.ne.s32.totalorder %s320, %s321
    %p332 = scmp.eq.s32.totalorder %s24, 0
    %p333 = por %p331, %p332
    %p334 = scmp.ne.s32.totalorder %s320, %s321
    %p335 = scmp.eq.s32.totalorder %s25, 1
    %p336 = por %p334, %p335
    %p338 = scmp.ne.s32.totalorder %s321, %s337
    %p339 = scmp.eq.s32.totalorder %s25, 0
    %p340 = por %p338, %p339
    %p341 = scmp.le.s32.totalorder 1, %s19
    %p342 = scmp.lt.s32.totalorder %s19, 3
    %p343 = pnand %p341, %p342
    %p344 = pneg %p343
    // Predicated region
    $region9: #{attention_forward.1} parent=5 // pred_check
      _
    $region10: #{attention_forward.1} parent=5 // pred_check_branch
      %346 = sbr.rel (%p343) target = $region12
    $region11: #{attention_forward.1} parent=5 // pred_region
      %s347 = ssub.s32 %s19, 1
      // Predicated region
      $region13: #{attention_forward.1} parent=11 // pred_check
        %p348 = pneg %p118
      $region14: #{attention_forward.1} parent=11 // pred_check_branch
        %350 = sbr.rel (%p348) target = $region16
      $region15: #{attention_forward.1} parent=11 // pred_region
        _
      $region16: #{attention_forward.1} parent=11 // pred_fallthru
        _
      // Predicated region
      $region17: #{attention_forward.1} parent=11 // pred_check
        %p351 = pneg %p139
      $region18: #{attention_forward.1} parent=11 // pred_check_branch
        %353 = sbr.rel (%p351) target = $region20
      $region19: #{attention_forward.1} parent=11 // pred_region
        _
      $region20: #{attention_forward.1} parent=11 // pred_fallthru
        _
      // Predicated region
      $region21: #{attention_forward.1} parent=11 // pred_check
        %p354 = pneg %p160
      $region22: #{attention_forward.1} parent=11 // pred_check_branch
        %356 = sbr.rel (%p354) target = $region24
      $region23: #{attention_forward.1} parent=11 // pred_region
        _
      $region24: #{attention_forward.1} parent=11 // pred_fallthru
        _
      // Predicated region
      $region25: #{attention_forward.1} parent=11 // pred_check
        %p357 = pneg %p181
      $region26: #{attention_forward.1} parent=11 // pred_check_branch
        %359 = sbr.rel (%p357) target = $region28
      $region27: #{attention_forward.1} parent=11 // pred_region
        _
      $region28: #{attention_forward.1} parent=11 // pred_fallthru
        _
      // Predicated region
      $region29: #{attention_forward.1} parent=11 // pred_check
        %p360 = pneg %p202
      $region30: #{attention_forward.1} parent=11 // pred_check_branch
        %362 = sbr.rel (%p360) target = $region32
      $region31: #{attention_forward.1} parent=11 // pred_region
        _
      $region32: #{attention_forward.1} parent=11 // pred_fallthru
        _
      // Predicated region
      $region33: #{attention_forward.1} parent=11 // pred_check
        %p363 = pneg %p223
      $region34: #{attention_forward.1} parent=11 // pred_check_branch
        %365 = sbr.rel (%p363) target = $region36
      $region35: #{attention_forward.1} parent=11 // pred_region
        _
      $region36: #{attention_forward.1} parent=11 // pred_fallthru
        _
      // Predicated region
      $region37: #{attention_forward.1} parent=11 // pred_check
        %p366 = pneg %p244
      $region38: #{attention_forward.1} parent=11 // pred_check_branch
        %368 = sbr.rel (%p366) target = $region40
      $region39: #{attention_forward.1} parent=11 // pred_region
        _
      $region40: #{attention_forward.1} parent=11 // pred_fallthru
        _
      // Predicated region
      $region41: #{attention_forward.1} parent=11 // pred_check
        %p369 = pneg %p265
      $region42: #{attention_forward.1} parent=11 // pred_check_branch
        %371 = sbr.rel (%p369) target = $region44
      $region43: #{attention_forward.1} parent=11 // pred_region
        _
      $region44: #{attention_forward.1} parent=11 // pred_fallthru
        _
      // Predicated region
      $region45: #{attention_forward.1} parent=11 // pred_check
        %p372 = pneg %p286
      $region46: #{attention_forward.1} parent=11 // pred_check_branch
        %374 = sbr.rel (%p372) target = $region48
      $region47: #{attention_forward.1} parent=11 // pred_region
        _
      $region48: #{attention_forward.1} parent=11 // pred_fallthru
        _
      // Predicated region
      $region49: #{attention_forward.1} parent=11 // pred_check
        %p375 = pneg %p307
      $region50: #{attention_forward.1} parent=11 // pred_check_branch
        %377 = sbr.rel (%p375) target = $region52
      $region51: #{attention_forward.1} parent=11 // pred_region
        _
      $region52: #{attention_forward.1} parent=11 // pred_fallthru
        _
    $region12: #{attention_forward.1} parent=5 // pred_fallthru
      _
    %p378 = scmp.lt.s32.totalorder %s19, 2
    // Predicated region
    $region53: #{attention_forward.1} parent=5 // pred_check
      %p379 = pneg %p378
    $region54: #{attention_forward.1} parent=5 // pred_check_branch
      %381 = sbr.rel (%p379) target = $region56
    $region55: #{attention_forward.1} parent=5 // pred_region
      // Predicated region
      $region57: #{attention_forward.1} parent=55 // pred_check
        %p382 = pneg %p39
      $region58: #{attention_forward.1} parent=55 // pred_check_branch
        %384 = sbr.rel (%p382) target = $region60
      $region59: #{attention_forward.1} parent=55 // pred_region
        %p385 = scmp.lt.s32.totalorder %s19, 1
        %s386 = scalar_select %p385, %s19, 1
        %s387 = smul.addr %s386, 10
        %s388 = smul.addr %s387, 4
        %s389 = scalar_lea.vmem %s0, %s388
      $region60: #{attention_forward.1} parent=55 // pred_fallthru
        _
      // Predicated region
      $region61: #{attention_forward.1} parent=55 // pred_check
        %p390 = pneg %p65
      $region62: #{attention_forward.1} parent=55 // pred_check_branch
        %392 = sbr.rel (%p390) target = $region64
      $region63: #{attention_forward.1} parent=55 // pred_region
        %p393 = scmp.lt.s32.totalorder %s19, 1
        %s394 = scalar_select %p393, %s19, 1
        %s395 = smul.addr %s394, 10
        %s396 = smul.addr %s395, 4
        %s397 = scalar_lea.vmem %s1, %s396
      $region64: #{attention_forward.1} parent=55 // pred_fallthru
        _
      // Predicated region
      $region65: #{attention_forward.1} parent=55 // pred_check
        %p398 = pneg %p91
      $region66: #{attention_forward.1} parent=55 // pred_check_branch
        %400 = sbr.rel (%p398) target = $region68
      $region67: #{attention_forward.1} parent=55 // pred_region
        %p401 = scmp.lt.s32.totalorder %s19, 1
        %s402 = scalar_select %p401, %s19, 1
        %s403 = smul.addr %s402, 10
        %s404 = smul.addr %s403, 4
        %s405 = scalar_lea.vmem %s2, %s404
      $region68: #{attention_forward.1} parent=55 // pred_fallthru
        _
    $region56: #{attention_forward.1} parent=5 // pred_fallthru
      _
    %p406 = scmp.le.s32.totalorder 1, %s19
    %p407 = scmp.lt.s32.totalorder %s19, 3
    %p408 = pnand %p406, %p407
    %p409 = pneg %p408
    // Predicated region
    $region69: #{attention_forward.1} parent=5 // pred_check
      _
    $region70: #{attention_forward.1} parent=5 // pred_check_branch
      %411 = sbr.rel (%p408) target = $region72
    $region71: #{attention_forward.1} parent=5 // pred_region
      %s412 = ssub.s32 %s19, 1
      %p413 = scmp.lt.s32.totalorder %s24, 1
      %s414 = scalar_select %p413, %s24, 1
      %s415 = smul.addr %s414, 10
      %s416 = smul.addr %s415, 4
      %s417 = scalar_lea.vmem %s0, %s416
      %p418 = pneg %p45
      %p419 = pneg %p42
      %p420 = scmp.lt.s32.totalorder %s24, 1
      %s421 = scalar_select %p420, %s24, 1
      %s422 = smul.addr %s421, 10
      %s423 = smul.addr %s422, 4
      %s424 = scalar_lea.vmem %s1, %s423
      %p425 = pneg %p71
      %p426 = pneg %p68
      %p427 = scmp.lt.s32.totalorder %s24, 1
      %s428 = scalar_select %p427, %s24, 1
      %s429 = smul.addr %s428, 10
      %s430 = smul.addr %s429, 4
      %s431 = scalar_lea.vmem %s2, %s430
      %p432 = pneg %p97
      %p433 = pneg %p94
      %p434 = pneg %p118
      %p435 = pneg %p115
      %p436 = pneg %p139
      %p437 = pneg %p136
      %p438 = pneg %p160
      %p439 = pneg %p157
      %p440 = pneg %p181
      %p441 = pneg %p178
      %p442 = pneg %p202
      %p443 = pneg %p199
      %p444 = pneg %p223
      %p445 = pneg %p220
      %p446 = pneg %p244
      %p447 = pneg %p241
      %p448 = pneg %p265
      %p449 = pneg %p262
      %p450 = pneg %p286
      %p451 = pneg %p283
      %p452 = pneg %p307
      %p453 = pneg %p304
      %p454 = pneg %p333
      %p455 = pneg %p330
      %p456 = scmp.lt.s32.totalorder %s24, 1
      %s457 = scalar_select %p456, %s24, 1
      %s458 = smul.addr %s457, 2
      %s459 = smul.addr %s458, 4
      %s460 = scalar_lea.vmem %s13, %s459
      %p461 = scmp.lt.s32.totalorder %s24, 1
      %s462 = scalar_select %p461, %s24, 1
      %s463 = smul.addr %s462, 10
      %s464 = smul.addr %s463, 4
      %s465 = scalar_lea.vmem %s0, %s464
      %p466 = scmp.lt.s32.totalorder %s24, 1
      %s467 = scalar_select %p466, %s24, 1
      %s468 = smul.addr %s467, 10
      %s469 = smul.addr %s468, 4
      %s470 = scalar_lea.vmem %s1, %s469
      %p471 = scmp.lt.s32.totalorder %s24, 1
      %s472 = scalar_select %p471, %s24, 1
      %s473 = smul.addr %s472, 10
      %s474 = smul.addr %s473, 4
      %s475 = scalar_lea.vmem %s2, %s474
      %p476 = scmp.lt.s32.totalorder %s24, 1
      %s477 = scalar_select %p476, %s24, 1
      %s478 = smul.addr %s477, 2
      %s479 = smul.addr %s478, 4
      %s480 = scalar_lea.vmem %s13, %s479
      %v482 = vld [vmem:[%s3] sm:$0x3]
      %v483 = vld [vmem:[%s465] sm:$0xff]
      %v484 = vld [vmem:[%s465 + $0x8] sm:$0xff]
      %v485 = vld [vmem:[%s465 + $0x10] sm:$0xff]
      %v486 = vld [vmem:[%s465 + $0x18] sm:$0xff]
      %v487 = vld [vmem:[%s465 + $0x20] sm:$0x33]
      %v488 = vld [vmem:[%s4] sm:$0xf]
      %490 = vset.pattern.permute.xlu0 0
      %491 = vperm.xlu0 %490, %v488
      %v492 = vpop.permute.xlu0 %491
      %v499 = vunpack.c.l.b16 %v483
      %v500 = vunpack.c.h.b16 %v483
      %v501 = vunpack.c.l.b16 %v484
      %v502 = vunpack.c.h.b16 %v484
      %v503 = vunpack.c.l.b16 %v485
      %v504 = vunpack.c.h.b16 %v485
      %v505 = vunpack.c.l.b16 %v486
      %v506 = vunpack.c.h.b16 %v486
      %v507 = vunpack.c.l.b16 %v487
      %v508 = vunpack.c.h.b16 %v487
      %v509 = vpack.c.b16 %v501, %v499
      %v510 = vpack.c.b16 %v502, %v500
      %v511 = vpack.c.b16 %v505, %v503
      %v512 = vpack.c.b16 %v506, %v504
      %v513 = vpack.c.b16 %v507, %v507
      %v514 = vpack.c.b16 %v508, %v508
      %vm519 = vcmask 293888
      %v521 = vsel %vm519, %v482, 0
      %vm523 = vcmask 1041408
      %v525 = vsel %vm523, %v513, 0
      %v528 = vsel %vm523, %v514, 0
      %530 = vmatprep.subr.bf16.mxu0 %v510
      %531 = vmatpush1.bf16.msra.mxu0 %v509
      %532 = vmatprep.subr.bf16.mxu0 %v512
      %533 = vmatpush1.bf16.msra.mxu0 %v511
      %534 = vmatprep.subr.bf16.mxu0 %v528
      %535 = vmatpush1.bf16.msra.mxu0 %v525
      %536 = vmatprep.subr.bf16.mxu0 0
      %537 = vmatpush1.bf16.msra.mxu0 0
      %538 = vmatprep.subr.bf16.mxu0 0
      %539 = vmatpush1.bf16.msra.mxu0 0
      %540 = vmatprep.subr.bf16.mxu0 0
      %541 = vmatpush1.bf16.msra.mxu0 0
      %542 = vmatprep.subr.bf16.mxu0 0
      %543 = vmatpush1.bf16.msra.mxu0 0
      %544 = vmatprep.subr.bf16.mxu0 0
      %545 = vmatpush1.bf16.msra.mxu0 0
      %546 = vmatprep.subr.bf16.mxu0 0
      %547 = vmatpush1.bf16.msra.mxu0 0
      %548 = vmatprep.subr.bf16.mxu0 0
      %549 = vmatpush1.bf16.msra.mxu0 0
      %550 = vmatprep.subr.bf16.mxu0 0
      %551 = vmatpush1.bf16.msra.mxu0 0
      %552 = vmatprep.subr.bf16.mxu0 0
      %553 = vmatpush1.bf16.msra.mxu0 0
      %554 = vmatprep.subr.bf16.mxu0 0
      %555 = vmatpush1.bf16.msra.mxu0 0
      %556 = vmatprep.subr.bf16.mxu0 0
      %557 = vmatpush1.bf16.msra.mxu0 0
      %558 = vmatprep.subr.bf16.mxu0 0
      %559 = vmatpush1.bf16.msra.mxu0 0
      %560 = vmatprep.subr.bf16.mxu0 0
      %561 = vmatpush1.bf16.msra.mxu0 0
      %562 = vmatprep.mubr.bf16.mxu0 0
      %563 = vmatmul.mubr.bf16.gmra.mrb[0].mxu0 %v521
      %v564 = vpop.f32.mrb[0].mxu0
      %v565 = vadd.f32 %v492, %v564
      %v566 = vpop.f32.mrb[0].mxu0
      %v567 = vadd.f32 %v492, %v566
      %v568 = vpop.f32.mrb[0].mxu0
      %v569 = vpop.f32.mrb[0].mxu0
      %570 = vdwg.mxu0
      %v571 = vmax.f32 %v565, 0.0
      %v572 = vmax.f32 %v567, 0.0
      %v573 = vld [vmem:[%s5] sm:$0x3]
      %v574 = vld [vmem:[%s470] sm:$0xff]
      %v575 = vld [vmem:[%s470 + $0x8] sm:$0xff]
      %v576 = vld [vmem:[%s470 + $0x10] sm:$0xff]
      %v577 = vld [vmem:[%s470 + $0x18] sm:$0xff]
      %v578 = vld [vmem:[%s470 + $0x20] sm:$0x33]
      %v579 = vld [vmem:[%s6] sm:$0xf]
      %581 = vset.pattern.permute.xlu0 0
      %582 = vperm.xlu0 %581, %v579
      %v583 = vpop.permute.xlu0 %582
      %v590 = vunpack.c.l.b16 %v574
      %v591 = vunpack.c.h.b16 %v574
      %v592 = vunpack.c.l.b16 %v575
      %v593 = vunpack.c.h.b16 %v575
      %v594 = vunpack.c.l.b16 %v576
      %v595 = vunpack.c.h.b16 %v576
      %v596 = vunpack.c.l.b16 %v577
      %v597 = vunpack.c.h.b16 %v577
      %v598 = vunpack.c.l.b16 %v578
      %v599 = vunpack.c.h.b16 %v578
      %v600 = vpack.c.b16 %v592, %v590
      %v601 = vpack.c.b16 %v593, %v591
      %v602 = vpack.c.b16 %v596, %v594
      %v603 = vpack.c.b16 %v597, %v595
      %v604 = vpack.c.b16 %v598, %v598
      %v605 = vpack.c.b16 %v599, %v599
      %v611 = vsel %vm519, %v573, 0
      %v614 = vsel %vm523, %v604, 0
      %v617 = vsel %vm523, %v605, 0
      %619 = vmatprep.subr.bf16.mxu0 %v601
      %620 = vmatpush1.bf16.msra.mxu0 %v600
      %621 = vmatprep.subr.bf16.mxu0 %v603
      %622 = vmatpush1.bf16.msra.mxu0 %v602
      %623 = vmatprep.subr.bf16.mxu0 %v617
      %624 = vmatpush1.bf16.msra.mxu0 %v614
      %625 = vmatprep.subr.bf16.mxu0 0
      %626 = vmatpush1.bf16.msra.mxu0 0
      %627 = vmatprep.subr.bf16.mxu0 0
      %628 = vmatpush1.bf16.msra.mxu0 0
      %629 = vmatprep.subr.bf16.mxu0 0
      %630 = vmatpush1.bf16.msra.mxu0 0
      %631 = vmatprep.subr.bf16.mxu0 0
      %632 = vmatpush1.bf16.msra.mxu0 0
      %633 = vmatprep.subr.bf16.mxu0 0
      %634 = vmatpush1.bf16.msra.mxu0 0
      %635 = vmatprep.subr.bf16.mxu0 0
      %636 = vmatpush1.bf16.msra.mxu0 0
      %637 = vmatprep.subr.bf16.mxu0 0
      %638 = vmatpush1.bf16.msra.mxu0 0
      %639 = vmatprep.subr.bf16.mxu0 0
      %640 = vmatpush1.bf16.msra.mxu0 0
      %641 = vmatprep.subr.bf16.mxu0 0
      %642 = vmatpush1.bf16.msra.mxu0 0
      %643 = vmatprep.subr.bf16.mxu0 0
      %644 = vmatpush1.bf16.msra.mxu0 0
      %645 = vmatprep.subr.bf16.mxu0 0
      %646 = vmatpush1.bf16.msra.mxu0 0
      %647 = vmatprep.subr.bf16.mxu0 0
      %648 = vmatpush1.bf16.msra.mxu0 0
      %649 = vmatprep.subr.bf16.mxu0 0
      %650 = vmatpush1.bf16.msra.mxu0 0
      %651 = vmatprep.mubr.bf16.mxu0 0
      %652 = vmatmul.mubr.bf16.gmra.mrb[0].mxu0 %v611
      %v653 = vpop.f32.mrb[0].mxu0
      %v654 = vadd.f32 %v583, %v653
      %v655 = vpop.f32.mrb[0].mxu0
      %v656 = vadd.f32 %v583, %v655
      %v657 = vpop.f32.mrb[0].mxu0
      %v658 = vpop.f32.mrb[0].mxu0
      %659 = vdwg.mxu0
      %v660 = vmax.f32 %v654, 0.0
      %v661 = vmax.f32 %v656, 0.0
      %v662 = vld [vmem:[%s7] sm:$0x3]
      %v663 = vld [vmem:[%s475] sm:$0xff]
      %v664 = vld [vmem:[%s475 + $0x8] sm:$0xff]
      %v665 = vld [vmem:[%s475 + $0x10] sm:$0xff]
      %v666 = vld [vmem:[%s475 + $0x18] sm:$0xff]
      %v667 = vld [vmem:[%s475 + $0x20] sm:$0x33]
      %v668 = vld [vmem:[%s8] sm:$0xf]
      %670 = vset.pattern.permute.xlu0 0
      %671 = vperm.xlu0 %670, %v668
      %v672 = vpop.permute.xlu0 %671
      %v679 = vunpack.c.l.b16 %v663
      %v680 = vunpack.c.h.b16 %v663
      %v681 = vunpack.c.l.b16 %v664
      %v682 = vunpack.c.h.b16 %v664
      %v683 = vunpack.c.l.b16 %v665
      %v684 = vunpack.c.h.b16 %v665
      %v685 = vunpack.c.l.b16 %v666
      %v686 = vunpack.c.h.b16 %v666
      %v687 = vunpack.c.l.b16 %v667
      %v688 = vunpack.c.h.b16 %v667
      %v689 = vpack.c.b16 %v681, %v679
      %v690 = vpack.c.b16 %v682, %v680
      %v691 = vpack.c.b16 %v685, %v683
      %v692 = vpack.c.b16 %v686, %v684
      %v693 = vpack.c.b16 %v687, %v687
      %v694 = vpack.c.b16 %v688, %v688
      %v700 = vsel %vm519, %v662, 0
      %v703 = vsel %vm523, %v693, 0
      %v706 = vsel %vm523, %v694, 0
      %708 = vmatprep.subr.bf16.mxu0 %v690
      %709 = vmatpush1.bf16.msra.mxu0 %v689
      %710 = vmatprep.subr.bf16.mxu0 %v692
      %711 = vmatpush1.bf16.msra.mxu0 %v691
      %712 = vmatprep.subr.bf16.mxu0 %v706
      %713 = vmatpush1.bf16.msra.mxu0 %v703
      %714 = vmatprep.subr.bf16.mxu0 0
      %715 = vmatpush1.bf16.msra.mxu0 0
      %716 = vmatprep.subr.bf16.mxu0 0
      %717 = vmatpush1.bf16.msra.mxu0 0
      %718 = vmatprep.subr.bf16.mxu0 0
      %719 = vmatpush1.bf16.msra.mxu0 0
      %720 = vmatprep.subr.bf16.mxu0 0
      %721 = vmatpush1.bf16.msra.mxu0 0
      %722 = vmatprep.subr.bf16.mxu0 0
      %723 = vmatpush1.bf16.msra.mxu0 0
      %724 = vmatprep.subr.bf16.mxu0 0
      %725 = vmatpush1.bf16.msra.mxu0 0
      %726 = vmatprep.subr.bf16.mxu0 0
      %727 = vmatpush1.bf16.msra.mxu0 0
      %728 = vmatprep.subr.bf16.mxu0 0
      %729 = vmatpush1.bf16.msra.mxu0 0
      %730 = vmatprep.subr.bf16.mxu0 0
      %731 = vmatpush1.bf16.msra.mxu0 0
      %732 = vmatprep.subr.bf16.mxu0 0
      %733 = vmatpush1.bf16.msra.mxu0 0
      %734 = vmatprep.subr.bf16.mxu0 0
      %735 = vmatpush1.bf16.msra.mxu0 0
      %736 = vmatprep.subr.bf16.mxu0 0
      %737 = vmatpush1.bf16.msra.mxu0 0
      %738 = vmatprep.subr.bf16.mxu0 0
      %739 = vmatpush1.bf16.msra.mxu0 0
      %740 = vmatprep.mubr.bf16.mxu0 0
      %741 = vmatmul.mubr.bf16.gmra.mrb[0].mxu0 %v700
      %v742 = vpop.f32.mrb[0].mxu0
      %v743 = vadd.f32 %v672, %v742
      %v744 = vpop.f32.mrb[0].mxu0
      %v745 = vadd.f32 %v672, %v744
      %v746 = vpop.f32.mrb[0].mxu0
      %v747 = vpop.f32.mrb[0].mxu0
      %748 = vdwg.mxu0
      %v749 = vmax.f32 %v743, 0.0
      %v750 = vmax.f32 %v745, 0.0
      %751 = vmatprep.subr.mxu0 %v661
      %752 = vmatpush1.xpose.msra.mxu0 %v660
      %753 = vmatprep.subr.mxu0 0.0
      %754 = vmatpush1.xpose.msra.mxu0 0.0
      %755 = vmatprep.subr.mxu0 0.0
      %756 = vmatpush1.xpose.msra.mxu0 0.0
      %757 = vmatprep.subr.mxu0 0.0
      %758 = vmatpush1.xpose.msra.mxu0 0.0
      %759 = vmatprep.subr.mxu0 0.0
      %760 = vmatpush1.xpose.msra.mxu0 0.0
      %761 = vmatprep.subr.mxu0 0.0
      %762 = vmatpush1.xpose.msra.mxu0 0.0
      %763 = vmatprep.subr.mxu0 0.0
      %764 = vmatpush1.xpose.msra.mxu0 0.0
      %765 = vmatprep.subr.mxu0 0.0
      %766 = vmatpush1.xpose.msra.mxu0 0.0
      %767 = vmatprep.subr.mxu0 0.0
      %768 = vmatpush1.xpose.msra.mxu0 0.0
      %769 = vmatprep.subr.mxu0 0.0
      %770 = vmatpush1.xpose.msra.mxu0 0.0
      %771 = vmatprep.subr.mxu0 0.0
      %772 = vmatpush1.xpose.msra.mxu0 0.0
      %773 = vmatprep.subr.mxu0 0.0
      %774 = vmatpush1.xpose.msra.mxu0 0.0
      %775 = vmatprep.subr.mxu0 0.0
      %776 = vmatpush1.xpose.msra.mxu0 0.0
      %777 = vmatprep.subr.mxu0 0.0
      %778 = vmatpush1.xpose.msra.mxu0 0.0
      %779 = vmatprep.subr.mxu0 0.0
      %780 = vmatpush1.xpose.msra.mxu0 0.0
      %781 = vmatprep.subr.mxu0 0.0
      %782 = vmatpush1.xpose.msra.mxu0 0.0
      %783 = vmatprep.subr.mxu0 0.0
      %784 = vmatpush1.xpose.msra.mxu0 0.0
      %785 = vmatprep.subr.mxu0 0.0
      %786 = vmatpush1.xpose.msra.mxu0 0.0
      %787 = vmatprep.subr.mxu0 0.0
      %788 = vmatpush1.xpose.msra.mxu0 0.0
      %789 = vmatprep.subr.mxu0 0.0
      %790 = vmatpush1.xpose.msra.mxu0 0.0
      %791 = vmatprep.subr.mxu0 0.0
      %792 = vmatpush1.xpose.msra.mxu0 0.0
      %793 = vmatprep.subr.mxu0 0.0
      %794 = vmatpush1.xpose.msra.mxu0 0.0
      %795 = vmatprep.subr.mxu0 0.0
      %796 = vmatpush1.xpose.msra.mxu0 0.0
      %797 = vmatprep.subr.mxu0 0.0
      %798 = vmatpush1.xpose.msra.mxu0 0.0
      %799 = vmatprep.subr.mxu0 0.0
      %800 = vmatpush1.xpose.msra.mxu0 0.0
      %801 = vmatprep.subr.mxu0 0.0
      %802 = vmatpush1.xpose.msra.mxu0 0.0
      %803 = vmatprep.subr.mxu0 0.0
      %804 = vmatpush1.xpose.msra.mxu0 0.0
      %805 = vmatprep.subr.mxu0 0.0
      %806 = vmatpush1.xpose.msra.mxu0 0.0
      %807 = vmatprep.subr.mxu0 0.0
      %808 = vmatpush1.xpose.msra.mxu0 0.0
      %809 = vmatprep.subr.mxu0 0.0
      %810 = vmatpush1.xpose.msra.mxu0 0.0
      %811 = vmatprep.subr.mxu0 0.0
      %812 = vmatpush1.xpose.msra.mxu0 0.0
      %813 = vmatprep.subr.mxu0 0.0
      %814 = vmatpush1.xpose.msra.mxu0 0.0
      %815 = vmatprep.mubr.f32.mxu0 %v572
      %816 = vmatmul.mubr.f32.gmra.mrb[0].mxu0 %v571
      %v817 = vpop.f32.mrb[0].mxu0
      %v818 = vadd.f32 0.0, %v817
      %v819 = vpop.f32.mrb[0].mxu0
      %820 = vdwg.mxu0
      %vm821 = vcmask 27648
      %v822 = vsel %vm821, %v818, -inf
      %823 = vmax.xlane.f32.xlu0 %v822
      %v824 = vpop.xlane.xlu0 %823
      %v825 = vsub.f32 %v818, %v824
      %v826 = vmul.f32 %v825, 1.442695
      %v827 = vpow.pop %v826
      %v828 = vsel %vm821, %v827, 0.0
      %829 = vadd.xlane.f32.xlu0 %v828
      %v830 = vpop.xlane.xlu0 %829
      %v831 = vrcp.pop %v830
      %v832 = vmul.f32 %v827, %v831
      %vm833 = vcmask 31744
      %v835 = vsel %vm833, %v832, 0
      %vm837 = vcmask 1043456
      %v839 = vsel %vm837, %v749, 0
      %v842 = vsel %vm837, %v750, 0
      %844 = vmatprep.subr.mxu0 %v842
      %845 = vmatpush1.msra.mxu0 %v839
      %846 = vmatprep.subr.mxu0 0.0
      %847 = vmatpush1.msra.mxu0 0.0
      %848 = vmatprep.subr.mxu0 0.0
      %849 = vmatpush1.msra.mxu0 0.0
      %850 = vmatprep.subr.mxu0 0.0
      %851 = vmatpush1.msra.mxu0 0.0
      %852 = vmatprep.subr.mxu0 0.0
      %853 = vmatpush1.msra.mxu0 0.0
      %854 = vmatprep.subr.mxu0 0.0
      %855 = vmatpush1.msra.mxu0 0.0
      %856 = vmatprep.subr.mxu0 0.0
      %857 = vmatpush1.msra.mxu0 0.0
      %858 = vmatprep.subr.mxu0 0.0
      %859 = vmatpush1.msra.mxu0 0.0
      %860 = vmatprep.subr.mxu0 0.0
      %861 = vmatpush1.msra.mxu0 0.0
      %862 = vmatprep.subr.mxu0 0.0
      %863 = vmatpush1.msra.mxu0 0.0
      %864 = vmatprep.subr.mxu0 0.0
      %865 = vmatpush1.msra.mxu0 0.0
      %866 = vmatprep.subr.mxu0 0.0
      %867 = vmatpush1.msra.mxu0 0.0
      %868 = vmatprep.subr.mxu0 0.0
      %869 = vmatpush1.msra.mxu0 0.0
      %870 = vmatprep.subr.mxu0 0.0
      %871 = vmatpush1.msra.mxu0 0.0
      %872 = vmatprep.subr.mxu0 0.0
      %873 = vmatpush1.msra.mxu0 0.0
      %874 = vmatprep.subr.mxu0 0.0
      %875 = vmatpush1.msra.mxu0 0.0
      %876 = vmatprep.subr.mxu0 0.0
      %877 = vmatpush1.msra.mxu0 0.0
      %878 = vmatprep.subr.mxu0 0.0
      %879 = vmatpush1.msra.mxu0 0.0
      %880 = vmatprep.subr.mxu0 0.0
      %881 = vmatpush1.msra.mxu0 0.0
      %882 = vmatprep.subr.mxu0 0.0
      %883 = vmatpush1.msra.mxu0 0.0
      %884 = vmatprep.subr.mxu0 0.0
      %885 = vmatpush1.msra.mxu0 0.0
      %886 = vmatprep.subr.mxu0 0.0
      %887 = vmatpush1.msra.mxu0 0.0
      %888 = vmatprep.subr.mxu0 0.0
      %889 = vmatpush1.msra.mxu0 0.0
      %890 = vmatprep.subr.mxu0 0.0
      %891 = vmatpush1.msra.mxu0 0.0
      %892 = vmatprep.subr.mxu0 0.0
      %893 = vmatpush1.msra.mxu0 0.0
      %894 = vmatprep.subr.mxu0 0.0
      %895 = vmatpush1.msra.mxu0 0.0
      %896 = vmatprep.subr.mxu0 0.0
      %897 = vmatpush1.msra.mxu0 0.0
      %898 = vmatprep.subr.mxu0 0.0
      %899 = vmatpush1.msra.mxu0 0.0
      %900 = vmatprep.subr.mxu0 0.0
      %901 = vmatpush1.msra.mxu0 0.0
      %902 = vmatprep.subr.mxu0 0.0
      %903 = vmatpush1.msra.mxu0 0.0
      %904 = vmatprep.subr.mxu0 0.0
      %905 = vmatpush1.msra.mxu0 0.0
      %906 = vmatprep.subr.mxu0 0.0
      %907 = vmatpush1.msra.mxu0 0.0
      %908 = vmatprep.mubr.f32.mxu0 0.0
      %909 = vmatmul.mubr.f32.gmra.mrb[0].mxu0 %v835
      %v910 = vpop.f32.mrb[0].mxu0
      %v911 = vadd.f32 0.0, %v910
      %v912 = vpop.f32.mrb[0].mxu0
      %v913 = vadd.f32 0.0, %v912
      %914 = vdwg.mxu0
      %v915 = vpack.c.bf16 %v911, %v911
      %v916 = vpack.c.bf16 %v913, %v913
      %v917 = vld [vmem:[%s9] sm:$0xff]
      %v918 = vld [vmem:[%s9 + $0x8] sm:$0xff]
      %v919 = vld [vmem:[%s9 + $0x10] sm:$0xff]
      %v920 = vld [vmem:[%s9 + $0x18] sm:$0xff]
      %v921 = vld [vmem:[%s9 + $0x20] sm:$0xff]
      %v922 = vld [vmem:[%s9 + $0x28] sm:$0xff]
      %v923 = vld [vmem:[%s9 + $0x30] sm:$0xff]
      %v924 = vld [vmem:[%s9 + $0x38] sm:$0xff]
      %v925 = vld [vmem:[%s9 + $0x40] sm:$0xff]
      %v926 = vld [vmem:[%s9 + $0x48] sm:$0xff]
      %v927 = vld [vmem:[%s9 + $0x50] sm:$0xff]
      %v928 = vld [vmem:[%s9 + $0x58] sm:$0xff]
      %v929 = vld [vmem:[%s9 + $0x60] sm:$0xff]
      %v930 = vld [vmem:[%s9 + $0x68] sm:$0xff]
      %v931 = vld [vmem:[%s9 + $0x70] sm:$0xff]
      %v932 = vld [vmem:[%s9 + $0x78] sm:$0xff]
      %v933 = vld [vmem:[%s9 + $0x80] sm:$0xff]
      %v934 = vld [vmem:[%s9 + $0x88] sm:$0xff]
      %v935 = vld [vmem:[%s9 + $0x90] sm:$0xff]
      %v936 = vld [vmem:[%s9 + $0x98] sm:$0xff]
      %v937 = vld [vmem:[%s9 + $0xa0] sm:$0xff]
      %v938 = vld [vmem:[%s9 + $0xa8] sm:$0xff]
      %v939 = vld [vmem:[%s9 + $0xb0] sm:$0xff]
      %v940 = vld [vmem:[%s9 + $0xb8] sm:$0xff]
      %v941 = vld [vmem:[%s9 + $0xc0] sm:$0xff]
      %v942 = vld [vmem:[%s9 + $0xc8] sm:$0xff]
      %v943 = vld [vmem:[%s9 + $0xd0] sm:$0xff]
      %v944 = vld [vmem:[%s9 + $0xd8] sm:$0xff]
      %v945 = vld [vmem:[%s9 + $0xe0] sm:$0xff]
      %v946 = vld [vmem:[%s9 + $0xe8] sm:$0xff]
      %v947 = vld [vmem:[%s9 + $0xf0] sm:$0xff]
      %v948 = vld [vmem:[%s9 + $0xf8] sm:$0xff]
      %v949 = vld [vmem:[%s9 + $0x100] sm:$0xff]
      %v950 = vld [vmem:[%s9 + $0x108] sm:$0xff]
      %v951 = vld [vmem:[%s9 + $0x110] sm:$0xff]
      %v952 = vld [vmem:[%s9 + $0x118] sm:$0xff]
      %v953 = vld [vmem:[%s9 + $0x120] sm:$0xff]
      %v954 = vld [vmem:[%s9 + $0x128] sm:$0xff]
      %v955 = vld [vmem:[%s9 + $0x130] sm:$0xff]
      %v956 = vld [vmem:[%s9 + $0x138] sm:$0xff]
      %v957 = vld [vmem:[%s9 + $0x140] sm:$0xff]
      %v958 = vld [vmem:[%s9 + $0x148] sm:$0xff]
      %v959 = vld [vmem:[%s9 + $0x150] sm:$0xff]
      %v960 = vld [vmem:[%s9 + $0x158] sm:$0xff]
      %v961 = vld [vmem:[%s9 + $0x160] sm:$0xff]
      %v962 = vld [vmem:[%s9 + $0x168] sm:$0xff]
      %v963 = vld [vmem:[%s9 + $0x170] sm:$0xff]
      %v964 = vld [vmem:[%s9 + $0x178] sm:$0xff]
      %v965 = vld [vmem:[%s9 + $0x180] sm:$0xff]
      %v966 = vld [vmem:[%s9 + $0x188] sm:$0xff]
      %v967 = vld [vmem:[%s9 + $0x190] sm:$0xff]
      %v968 = vld [vmem:[%s9 + $0x198] sm:$0xff]
      %v969 = vld [vmem:[%s9 + $0x1a0] sm:$0xff]
      %v970 = vld [vmem:[%s9 + $0x1a8] sm:$0xff]
      %v971 = vld [vmem:[%s9 + $0x1b0] sm:$0xff]
      %v972 = vld [vmem:[%s9 + $0x1b8] sm:$0xff]
      %v973 = vld [vmem:[%s9 + $0x1c0] sm:$0xff]
      %v974 = vld [vmem:[%s9 + $0x1c8] sm:$0xff]
      %v975 = vld [vmem:[%s9 + $0x1d0] sm:$0xff]
      %v976 = vld [vmem:[%s9 + $0x1d8] sm:$0xff]
      %v977 = vld [vmem:[%s9 + $0x1e0] sm:$0xff]
      %v978 = vld [vmem:[%s9 + $0x1e8] sm:$0xff]
      %v979 = vld [vmem:[%s9 + $0x1f0] sm:$0xff]
      %v980 = vld [vmem:[%s9 + $0x1f8] sm:$0xff]
      %v981 = vld [vmem:[%s10] sm:$0xf]
      %v983 = vlaneseq
      %v984 = vshrl.u32 %v983, 7
      %v985 = vsub.s32 0, %v984
      %v986 = vrot.slane %v981, %v985
      %v987 = vlaneseq
      %v988 = vshrl.u32 %v987, 7
      %v989 = vsub.s32 1, %v988
      %v990 = vrot.slane %v981, %v989
      %v991 = vlaneseq
      %v992 = vshrl.u32 %v991, 7
      %v993 = vsub.s32 2, %v992
      %v994 = vrot.slane %v981, %v993
      %v995 = vlaneseq
      %v996 = vshrl.u32 %v995, 7
      %v997 = vsub.s32 3, %v996
      %v998 = vrot.slane %v981, %v997
      %v1067 = vunpack.c.l.b16 %v917
      %v1068 = vunpack.c.h.b16 %v917
      %v1069 = vunpack.c.l.b16 %v918
      %v1070 = vunpack.c.h.b16 %v918
      %v1071 = vunpack.c.l.b16 %v919
      %v1072 = vunpack.c.h.b16 %v919
      %v1073 = vunpack.c.l.b16 %v920
      %v1074 = vunpack.c.h.b16 %v920
      %v1075 = vunpack.c.l.b16 %v921
      %v1076 = vunpack.c.h.b16 %v921
      %v1077 = vunpack.c.l.b16 %v922
      %v1078 = vunpack.c.h.b16 %v922
      %v1079 = vunpack.c.l.b16 %v923
      %v1080 = vunpack.c.h.b16 %v923
      %v1081 = vunpack.c.l.b16 %v924
      %v1082 = vunpack.c.h.b16 %v924
      %v1083 = vunpack.c.l.b16 %v925
      %v1084 = vunpack.c.h.b16 %v925
      %v1085 = vunpack.c.l.b16 %v926
      %v1086 = vunpack.c.h.b16 %v926
      %v1087 = vunpack.c.l.b16 %v927
      %v1088 = vunpack.c.h.b16 %v927
      %v1089 = vunpack.c.l.b16 %v928
      %v1090 = vunpack.c.h.b16 %v928
      %v1091 = vunpack.c.l.b16 %v929
      %v1092 = vunpack.c.h.b16 %v929
      %v1093 = vunpack.c.l.b16 %v930
      %v1094 = vunpack.c.h.b16 %v930
      %v1095 = vunpack.c.l.b16 %v931
      %v1096 = vunpack.c.h.b16 %v931
      %v1097 = vunpack.c.l.b16 %v932
      %v1098 = vunpack.c.h.b16 %v932
      %v1099 = vunpack.c.l.b16 %v933
      %v1100 = vunpack.c.h.b16 %v933
      %v1101 = vunpack.c.l.b16 %v934
      %v1102 = vunpack.c.h.b16 %v934
      %v1103 = vunpack.c.l.b16 %v935
      %v1104 = vunpack.c.h.b16 %v935
      %v1105 = vunpack.c.l.b16 %v936
      %v1106 = vunpack.c.h.b16 %v936
      %v1107 = vunpack.c.l.b16 %v937
      %v1108 = vunpack.c.h.b16 %v937
      %v1109 = vunpack.c.l.b16 %v938
      %v1110 = vunpack.c.h.b16 %v938
      %v1111 = vunpack.c.l.b16 %v939
      %v1112 = vunpack.c.h.b16 %v939
      %v1113 = vunpack.c.l.b16 %v940
      %v1114 = vunpack.c.h.b16 %v940
      %v1115 = vunpack.c.l.b16 %v941
      %v1116 = vunpack.c.h.b16 %v941
      %v1117 = vunpack.c.l.b16 %v942
      %v1118 = vunpack.c.h.b16 %v942
      %v1119 = vunpack.c.l.b16 %v943
      %v1120 = vunpack.c.h.b16 %v943
      %v1121 = vunpack.c.l.b16 %v944
      %v1122 = vunpack.c.h.b16 %v944
      %v1123 = vunpack.c.l.b16 %v945
      %v1124 = vunpack.c.h.b16 %v945
      %v1125 = vunpack.c.l.b16 %v946
      %v1126 = vunpack.c.h.b16 %v946
      %v1127 = vunpack.c.l.b16 %v947
      %v1128 = vunpack.c.h.b16 %v947
      %v1129 = vunpack.c.l.b16 %v948
      %v1130 = vunpack.c.h.b16 %v948
      %v1131 = vunpack.c.l.b16 %v949
      %v1132 = vunpack.c.h.b16 %v949
      %v1133 = vunpack.c.l.b16 %v950
      %v1134 = vunpack.c.h.b16 %v950
      %v1135 = vunpack.c.l.b16 %v951
      %v1136 = vunpack.c.h.b16 %v951
      %v1137 = vunpack.c.l.b16 %v952
      %v1138 = vunpack.c.h.b16 %v952
      %v1139 = vunpack.c.l.b16 %v953
      %v1140 = vunpack.c.h.b16 %v953
      %v1141 = vunpack.c.l.b16 %v954
      %v1142 = vunpack.c.h.b16 %v954
      %v1143 = vunpack.c.l.b16 %v955
      %v1144 = vunpack.c.h.b16 %v955
      %v1145 = vunpack.c.l.b16 %v956
      %v1146 = vunpack.c.h.b16 %v956
      %v1147 = vunpack.c.l.b16 %v957
      %v1148 = vunpack.c.h.b16 %v957
      %v1149 = vunpack.c.l.b16 %v958
      %v1150 = vunpack.c.h.b16 %v958
      %v1151 = vunpack.c.l.b16 %v959
      %v1152 = vunpack.c.h.b16 %v959
      %v1153 = vunpack.c.l.b16 %v960
      %v1154 = vunpack.c.h.b16 %v960
      %v1155 = vunpack.c.l.b16 %v961
      %v1156 = vunpack.c.h.b16 %v961
      %v1157 = vunpack.c.l.b16 %v962
      %v1158 = vunpack.c.h.b16 %v962
      %v1159 = vunpack.c.l.b16 %v963
      %v1160 = vunpack.c.h.b16 %v963
      %v1161 = vunpack.c.l.b16 %v964
      %v1162 = vunpack.c.h.b16 %v964
      %v1163 = vunpack.c.l.b16 %v965
      %v1164 = vunpack.c.h.b16 %v965
      %v1165 = vunpack.c.l.b16 %v966
      %v1166 = vunpack.c.h.b16 %v966
      %v1167 = vunpack.c.l.b16 %v967
      %v1168 = vunpack.c.h.b16 %v967
      %v1169 = vunpack.c.l.b16 %v968
      %v1170 = vunpack.c.h.b16 %v968
      %v1171 = vunpack.c.l.b16 %v969
      %v1172 = vunpack.c.h.b16 %v969
      %v1173 = vunpack.c.l.b16 %v970
      %v1174 = vunpack.c.h.b16 %v970
      %v1175 = vunpack.c.l.b16 %v971
      %v1176 = vunpack.c.h.b16 %v971
      %v1177 = vunpack.c.l.b16 %v972
      %v1178 = vunpack.c.h.b16 %v972
      %v1179 = vunpack.c.l.b16 %v973
      %v1180 = vunpack.c.h.b16 %v973
      %v1181 = vunpack.c.l.b16 %v974
      %v1182 = vunpack.c.h.b16 %v974
      %v1183 = vunpack.c.l.b16 %v975
      %v1184 = vunpack.c.h.b16 %v975
      %v1185 = vunpack.c.l.b16 %v976
      %v1186 = vunpack.c.h.b16 %v976
      %v1187 = vunpack.c.l.b16 %v977
      %v1188 = vunpack.c.h.b16 %v977
      %v1189 = vunpack.c.l.b16 %v978
      %v1190 = vunpack.c.h.b16 %v978
      %v1191 = vunpack.c.l.b16 %v979
      %v1192 = vunpack.c.h.b16 %v979
      %v1193 = vunpack.c.l.b16 %v980
      %v1194 = vunpack.c.h.b16 %v980
      %v1195 = vpack.c.b16 %v1071, %v1067
      %v1196 = vpack.c.b16 %v1072, %v1068
      %v1197 = vpack.c.b16 %v1073, %v1069
      %v1198 = vpack.c.b16 %v1074, %v1070
      %v1199 = vpack.c.b16 %v1079, %v1075
      %v1200 = vpack.c.b16 %v1080, %v1076
      %v1201 = vpack.c.b16 %v1081, %v1077
      %v1202 = vpack.c.b16 %v1082, %v1078
      %v1203 = vpack.c.b16 %v1087, %v1083
      %v1204 = vpack.c.b16 %v1088, %v1084
      %v1205 = vpack.c.b16 %v1089, %v1085
      %v1206 = vpack.c.b16 %v1090, %v1086
      %v1207 = vpack.c.b16 %v1095, %v1091
      %v1208 = vpack.c.b16 %v1096, %v1092
      %v1209 = vpack.c.b16 %v1097, %v1093
      %v1210 = vpack.c.b16 %v1098, %v1094
      %v1211 = vpack.c.b16 %v1103, %v1099
      %v1212 = vpack.c.b16 %v1104, %v1100
      %v1213 = vpack.c.b16 %v1105, %v1101
      %v1214 = vpack.c.b16 %v1106, %v1102
      %v1215 = vpack.c.b16 %v1111, %v1107
      %v1216 = vpack.c.b16 %v1112, %v1108
      %v1217 = vpack.c.b16 %v1113, %v1109
      %v1218 = vpack.c.b16 %v1114, %v1110
      %v1219 = vpack.c.b16 %v1119, %v1115
      %v1220 = vpack.c.b16 %v1120, %v1116
      %v1221 = vpack.c.b16 %v1121, %v1117
      %v1222 = vpack.c.b16 %v1122, %v1118
      %v1223 = vpack.c.b16 %v1127, %v1123
      %v1224 = vpack.c.b16 %v1128, %v1124
      %v1225 = vpack.c.b16 %v1129, %v1125
      %v1226 = vpack.c.b16 %v1130, %v1126
      %v1227 = vpack.c.b16 %v1135, %v1131
      %v1228 = vpack.c.b16 %v1136, %v1132
      %v1229 = vpack.c.b16 %v1137, %v1133
      %v1230 = vpack.c.b16 %v1138, %v1134
      %v1231 = vpack.c.b16 %v1143, %v1139
      %v1232 = vpack.c.b16 %v1144, %v1140
      %v1233 = vpack.c.b16 %v1145, %v1141
      %v1234 = vpack.c.b16 %v1146, %v1142
      %v1235 = vpack.c.b16 %v1151, %v1147
      %v1236 = vpack.c.b16 %v1152, %v1148
      %v1237 = vpack.c.b16 %v1153, %v1149
      %v1238 = vpack.c.b16 %v1154, %v1150
      %v1239 = vpack.c.b16 %v1159, %v1155
      %v1240 = vpack.c.b16 %v1160, %v1156
      %v1241 = vpack.c.b16 %v1161, %v1157
      %v1242 = vpack.c.b16 %v1162, %v1158
      %v1243 = vpack.c.b16 %v1167, %v1163
      %v1244 = vpack.c.b16 %v1168, %v1164
      %v1245 = vpack.c.b16 %v1169, %v1165
      %v1246 = vpack.c.b16 %v1170, %v1166
      %v1247 = vpack.c.b16 %v1175, %v1171
      %v1248 = vpack.c.b16 %v1176, %v1172
      %v1249 = vpack.c.b16 %v1177, %v1173
      %v1250 = vpack.c.b16 %v1178, %v1174
      %v1251 = vpack.c.b16 %v1183, %v1179
      %v1252 = vpack.c.b16 %v1184, %v1180
      %v1253 = vpack.c.b16 %v1185, %v1181
      %v1254 = vpack.c.b16 %v1186, %v1182
      %v1255 = vpack.c.b16 %v1191, %v1187
      %v1256 = vpack.c.b16 %v1192, %v1188
      %v1257 = vpack.c.b16 %v1193, %v1189
      %v1258 = vpack.c.b16 %v1194, %v1190
      %1323 = vmatprep.subr.bf16.mxu0 %v1196
      %1324 = vmatpush1.bf16.msra.mxu0 %v1195
      %1325 = vmatprep.subr.bf16.mxu0 %v1200
      %1326 = vmatpush1.bf16.msra.mxu0 %v1199
      %1327 = vmatprep.subr.bf16.mxu0 %v1204
      %1328 = vmatpush1.bf16.msra.mxu0 %v1203
      %1329 = vmatprep.subr.bf16.mxu0 %v1208
      %1330 = vmatpush1.bf16.msra.mxu0 %v1207
      %1331 = vmatprep.subr.bf16.mxu0 %v1212
      %1332 = vmatpush1.bf16.msra.mxu0 %v1211
      %1333 = vmatprep.subr.bf16.mxu0 %v1216
      %1334 = vmatpush1.bf16.msra.mxu0 %v1215
      %1335 = vmatprep.subr.bf16.mxu0 %v1220
      %1336 = vmatpush1.bf16.msra.mxu0 %v1219
      %1337 = vmatprep.subr.bf16.mxu0 %v1224
      %1338 = vmatpush1.bf16.msra.mxu0 %v1223
      %1339 = vmatprep.subr.bf16.mxu0 %v1228
      %1340 = vmatpush1.bf16.msra.mxu0 %v1227
      %1341 = vmatprep.subr.bf16.mxu0 %v1232
      %1342 = vmatpush1.bf16.msra.mxu0 %v1231
      %1343 = vmatprep.subr.bf16.mxu0 %v1236
      %1344 = vmatpush1.bf16.msra.mxu0 %v1235
      %1345 = vmatprep.subr.bf16.mxu0 %v1240
      %1346 = vmatpush1.bf16.msra.mxu0 %v1239
      %1347 = vmatprep.subr.bf16.mxu0 %v1244
      %1348 = vmatpush1.bf16.msra.mxu0 %v1243
      %1349 = vmatprep.subr.bf16.mxu0 %v1248
      %1350 = vmatpush1.bf16.msra.mxu0 %v1247
      %1351 = vmatprep.subr.bf16.mxu0 %v1252
      %1352 = vmatpush1.bf16.msra.mxu0 %v1251
      %1353 = vmatprep.subr.bf16.mxu0 %v1256
      %1354 = vmatpush1.bf16.msra.mxu0 %v1255
      %1355 = vmatprep.mubr.bf16.mxu0 %v916
      %1356 = vmatmul.mubr.bf16.gmra.mrb[0].mxu0 %v915
      %v1357 = vpop.f32.mrb[0].mxu0
      %v1358 = vadd.f32 %v986, %v1357
      %v1359 = vpop.f32.mrb[0].mxu0
      %v1360 = vadd.f32 %v990, %v1359
      %v1361 = vpop.f32.mrb[0].mxu0
      %v1362 = vpop.f32.mrb[0].mxu0
      %1363 = vdwg.mxu0
      %1364 = vmatprep.subr.bf16.mxu0 %v1198
      %1365 = vmatpush1.bf16.msra.mxu0 %v1197
      %1366 = vmatprep.subr.bf16.mxu0 %v1202
      %1367 = vmatpush1.bf16.msra.mxu0 %v1201
      %1368 = vmatprep.subr.bf16.mxu0 %v1206
      %1369 = vmatpush1.bf16.msra.mxu0 %v1205
      %1370 = vmatprep.subr.bf16.mxu0 %v1210
      %1371 = vmatpush1.bf16.msra.mxu0 %v1209
      %1372 = vmatprep.subr.bf16.mxu0 %v1214
      %1373 = vmatpush1.bf16.msra.mxu0 %v1213
      %1374 = vmatprep.subr.bf16.mxu0 %v1218
      %1375 = vmatpush1.bf16.msra.mxu0 %v1217
      %1376 = vmatprep.subr.bf16.mxu0 %v1222
      %1377 = vmatpush1.bf16.msra.mxu0 %v1221
      %1378 = vmatprep.subr.bf16.mxu0 %v1226
      %1379 = vmatpush1.bf16.msra.mxu0 %v1225
      %1380 = vmatprep.subr.bf16.mxu0 %v1230
      %1381 = vmatpush1.bf16.msra.mxu0 %v1229
      %1382 = vmatprep.subr.bf16.mxu0 %v1234
      %1383 = vmatpush1.bf16.msra.mxu0 %v1233
      %1384 = vmatprep.subr.bf16.mxu0 %v1238
      %1385 = vmatpush1.bf16.msra.mxu0 %v1237
      %1386 = vmatprep.subr.bf16.mxu0 %v1242
      %1387 = vmatpush1.bf16.msra.mxu0 %v1241
      %1388 = vmatprep.subr.bf16.mxu0 %v1246
      %1389 = vmatpush1.bf16.msra.mxu0 %v1245
      %1390 = vmatprep.subr.bf16.mxu0 %v1250
      %1391 = vmatpush1.bf16.msra.mxu0 %v1249
      %1392 = vmatprep.subr.bf16.mxu0 %v1254
      %1393 = vmatpush1.bf16.msra.mxu0 %v1253
      %1394 = vmatprep.subr.bf16.mxu0 %v1258
      %1395 = vmatpush1.bf16.msra.mxu0 %v1257
      %1396 = vmatprep.mubr.bf16.mxu0 %v916
      %1397 = vmatmul.mubr.bf16.gmra.mrb[0].mxu0 %v915
      %v1398 = vpop.f32.mrb[0].mxu0
      %v1399 = vadd.f32 %v994, %v1398
      %v1400 = vpop.f32.mrb[0].mxu0
      %v1401 = vadd.f32 %v998, %v1400
      %v1402 = vpop.f32.mrb[0].mxu0
      %v1403 = vpop.f32.mrb[0].mxu0
      %1404 = vdwg.mxu0
      %v1405 = vmax.f32 %v1358, 0.0
      %v1406 = vmax.f32 %v1360, 0.0
      %v1407 = vmax.f32 %v1399, 0.0
      %v1408 = vmax.f32 %v1401, 0.0
      %v1409 = vpack.c.bf16 %v1405, %v1405
      %v1410 = vpack.c.bf16 %v1406, %v1406
      %v1411 = vpack.c.bf16 %v1407, %v1407
      %v1412 = vpack.c.bf16 %v1408, %v1408
      %v1413 = vld [vmem:[%s11] sm:$0xff]
      %v1414 = vld [vmem:[%s11 + $0x8] sm:$0xff]
      %v1415 = vld [vmem:[%s11 + $0x10] sm:$0xff]
      %v1416 = vld [vmem:[%s11 + $0x18] sm:$0xff]
      %v1417 = vld [vmem:[%s11 + $0x20] sm:$0xff]
      %v1418 = vld [vmem:[%s11 + $0x28] sm:$0xff]
      %v1419 = vld [vmem:[%s11 + $0x30] sm:$0xff]
      %v1420 = vld [vmem:[%s11 + $0x38] sm:$0xff]
      %v1421 = vld [vmem:[%s11 + $0x40] sm:$0xff]
      %v1422 = vld [vmem:[%s11 + $0x48] sm:$0xff]
      %v1423 = vld [vmem:[%s11 + $0x50] sm:$0xff]
      %v1424 = vld [vmem:[%s11 + $0x58] sm:$0xff]
      %v1425 = vld [vmem:[%s11 + $0x60] sm:$0xff]
      %v1426 = vld [vmem:[%s11 + $0x68] sm:$0xff]
      %v1427 = vld [vmem:[%s11 + $0x70] sm:$0xff]
      %v1428 = vld [vmem:[%s11 + $0x78] sm:$0xff]
      %v1429 = vld [vmem:[%s11 + $0x80] sm:$0xff]
      %v1430 = vld [vmem:[%s11 + $0x88] sm:$0xff]
      %v1431 = vld [vmem:[%s11 + $0x90] sm:$0xff]
      %v1432 = vld [vmem:[%s11 + $0x98] sm:$0xff]
      %v1433 = vld [vmem:[%s11 + $0xa0] sm:$0xff]
      %v1434 = vld [vmem:[%s11 + $0xa8] sm:$0xff]
      %v1435 = vld [vmem:[%s11 + $0xb0] sm:$0xff]
      %v1436 = vld [vmem:[%s11 + $0xb8] sm:$0xff]
      %v1437 = vld [vmem:[%s11 + $0xc0] sm:$0xff]
      %v1438 = vld [vmem:[%s11 + $0xc8] sm:$0xff]
      %v1439 = vld [vmem:[%s11 + $0xd0] sm:$0xff]
      %v1440 = vld [vmem:[%s11 + $0xd8] sm:$0xff]
      %v1441 = vld [vmem:[%s11 + $0xe0] sm:$0xff]
      %v1442 = vld [vmem:[%s11 + $0xe8] sm:$0xff]
      %v1443 = vld [vmem:[%s11 + $0xf0] sm:$0xff]
      %v1444 = vld [vmem:[%s11 + $0xf8] sm:$0xff]
      %v1445 = vld [vmem:[%s11 + $0x100] sm:$0xff]
      %v1446 = vld [vmem:[%s11 + $0x108] sm:$0xff]
      %v1447 = vld [vmem:[%s11 + $0x110] sm:$0xff]
      %v1448 = vld [vmem:[%s11 + $0x118] sm:$0xff]
      %v1449 = vld [vmem:[%s11 + $0x120] sm:$0xff]
      %v1450 = vld [vmem:[%s11 + $0x128] sm:$0xff]
      %v1451 = vld [vmem:[%s11 + $0x130] sm:$0xff]
      %v1452 = vld [vmem:[%s11 + $0x138] sm:$0xff]
      %v1453 = vld [vmem:[%s11 + $0x140] sm:$0xff]
      %v1454 = vld [vmem:[%s11 + $0x148] sm:$0xff]
      %v1455 = vld [vmem:[%s11 + $0x150] sm:$0xff]
      %v1456 = vld [vmem:[%s11 + $0x158] sm:$0xff]
      %v1457 = vld [vmem:[%s11 + $0x160] sm:$0xff]
      %v1458 = vld [vmem:[%s11 + $0x168] sm:$0xff]
      %v1459 = vld [vmem:[%s11 + $0x170] sm:$0xff]
      %v1460 = vld [vmem:[%s11 + $0x178] sm:$0xff]
      %v1461 = vld [vmem:[%s11 + $0x180] sm:$0xff]
      %v1462 = vld [vmem:[%s11 + $0x188] sm:$0xff]
      %v1463 = vld [vmem:[%s11 + $0x190] sm:$0xff]
      %v1464 = vld [vmem:[%s11 + $0x198] sm:$0xff]
      %v1465 = vld [vmem:[%s11 + $0x1a0] sm:$0xff]
      %v1466 = vld [vmem:[%s11 + $0x1a8] sm:$0xff]
      %v1467 = vld [vmem:[%s11 + $0x1b0] sm:$0xff]
      %v1468 = vld [vmem:[%s11 + $0x1b8] sm:$0xff]
      %v1469 = vld [vmem:[%s11 + $0x1c0] sm:$0xff]
      %v1470 = vld [vmem:[%s11 + $0x1c8] sm:$0xff]
      %v1471 = vld [vmem:[%s11 + $0x1d0] sm:$0xff]
      %v1472 = vld [vmem:[%s11 + $0x1d8] sm:$0xff]
      %v1473 = vld [vmem:[%s11 + $0x1e0] sm:$0xff]
      %v1474 = vld [vmem:[%s11 + $0x1e8] sm:$0xff]
      %v1475 = vld [vmem:[%s11 + $0x1f0] sm:$0xff]
      %v1476 = vld [vmem:[%s11 + $0x1f8] sm:$0xff]
      %v1477 = vld [vmem:[%s12] sm:$0x3]
      %v1479 = vlaneseq
      %v1480 = vshrl.u32 %v1479, 7
      %v1481 = vsub.s32 0, %v1480
      %v1482 = vrot.slane %v1477, %v1481
      %v1483 = vlaneseq
      %v1484 = vshrl.u32 %v1483, 7
      %v1485 = vsub.s32 1, %v1484
      %v1486 = vrot.slane %v1477, %v1485
      %v1553 = vunpack.c.l.b16 %v1413
      %v1554 = vunpack.c.h.b16 %v1413
      %v1555 = vunpack.c.l.b16 %v1414
      %v1556 = vunpack.c.h.b16 %v1414
      %v1557 = vunpack.c.l.b16 %v1415
      %v1558 = vunpack.c.h.b16 %v1415
      %v1559 = vunpack.c.l.b16 %v1416
      %v1560 = vunpack.c.h.b16 %v1416
      %v1561 = vunpack.c.l.b16 %v1417
      %v1562 = vunpack.c.h.b16 %v1417
      %v1563 = vunpack.c.l.b16 %v1418
      %v1564 = vunpack.c.h.b16 %v1418
      %v1565 = vunpack.c.l.b16 %v1419
      %v1566 = vunpack.c.h.b16 %v1419
      %v1567 = vunpack.c.l.b16 %v1420
      %v1568 = vunpack.c.h.b16 %v1420
      %v1569 = vunpack.c.l.b16 %v1421
      %v1570 = vunpack.c.h.b16 %v1421
      %v1571 = vunpack.c.l.b16 %v1422
      %v1572 = vunpack.c.h.b16 %v1422
      %v1573 = vunpack.c.l.b16 %v1423
      %v1574 = vunpack.c.h.b16 %v1423
      %v1575 = vunpack.c.l.b16 %v1424
      %v1576 = vunpack.c.h.b16 %v1424
      %v1577 = vunpack.c.l.b16 %v1425
      %v1578 = vunpack.c.h.b16 %v1425
      %v1579 = vunpack.c.l.b16 %v1426
      %v1580 = vunpack.c.h.b16 %v1426
      %v1581 = vunpack.c.l.b16 %v1427
      %v1582 = vunpack.c.h.b16 %v1427
      %v1583 = vunpack.c.l.b16 %v1428
      %v1584 = vunpack.c.h.b16 %v1428
      %v1585 = vunpack.c.l.b16 %v1429
      %v1586 = vunpack.c.h.b16 %v1429
      %v1587 = vunpack.c.l.b16 %v1430
      %v1588 = vunpack.c.h.b16 %v1430
      %v1589 = vunpack.c.l.b16 %v1431
      %v1590 = vunpack.c.h.b16 %v1431
      %v1591 = vunpack.c.l.b16 %v1432
      %v1592 = vunpack.c.h.b16 %v1432
      %v1593 = vunpack.c.l.b16 %v1433
      %v1594 = vunpack.c.h.b16 %v1433
      %v1595 = vunpack.c.l.b16 %v1434
      %v1596 = vunpack.c.h.b16 %v1434
      %v1597 = vunpack.c.l.b16 %v1435
      %v1598 = vunpack.c.h.b16 %v1435
      %v1599 = vunpack.c.l.b16 %v1436
      %v1600 = vunpack.c.h.b16 %v1436
      %v1601 = vunpack.c.l.b16 %v1437
      %v1602 = vunpack.c.h.b16 %v1437
      %v1603 = vunpack.c.l.b16 %v1438
      %v1604 = vunpack.c.h.b16 %v1438
      %v1605 = vunpack.c.l.b16 %v1439
      %v1606 = vunpack.c.h.b16 %v1439
      %v1607 = vunpack.c.l.b16 %v1440
      %v1608 = vunpack.c.h.b16 %v1440
      %v1609 = vunpack.c.l.b16 %v1441
      %v1610 = vunpack.c.h.b16 %v1441
      %v1611 = vunpack.c.l.b16 %v1442
      %v1612 = vunpack.c.h.b16 %v1442
      %v1613 = vunpack.c.l.b16 %v1443
      %v1614 = vunpack.c.h.b16 %v1443
      %v1615 = vunpack.c.l.b16 %v1444
      %v1616 = vunpack.c.h.b16 %v1444
      %v1617 = vunpack.c.l.b16 %v1445
      %v1618 = vunpack.c.h.b16 %v1445
      %v1619 = vunpack.c.l.b16 %v1446
      %v1620 = vunpack.c.h.b16 %v1446
      %v1621 = vunpack.c.l.b16 %v1447
      %v1622 = vunpack.c.h.b16 %v1447
      %v1623 = vunpack.c.l.b16 %v1448
      %v1624 = vunpack.c.h.b16 %v1448
      %v1625 = vunpack.c.l.b16 %v1449
      %v1626 = vunpack.c.h.b16 %v1449
      %v1627 = vunpack.c.l.b16 %v1450
      %v1628 = vunpack.c.h.b16 %v1450
      %v1629 = vunpack.c.l.b16 %v1451
      %v1630 = vunpack.c.h.b16 %v1451
      %v1631 = vunpack.c.l.b16 %v1452
      %v1632 = vunpack.c.h.b16 %v1452
      %v1633 = vunpack.c.l.b16 %v1453
      %v1634 = vunpack.c.h.b16 %v1453
      %v1635 = vunpack.c.l.b16 %v1454
      %v1636 = vunpack.c.h.b16 %v1454
      %v1637 = vunpack.c.l.b16 %v1455
      %v1638 = vunpack.c.h.b16 %v1455
      %v1639 = vunpack.c.l.b16 %v1456
      %v1640 = vunpack.c.h.b16 %v1456
      %v1641 = vunpack.c.l.b16 %v1457
      %v1642 = vunpack.c.h.b16 %v1457
      %v1643 = vunpack.c.l.b16 %v1458
      %v1644 = vunpack.c.h.b16 %v1458
      %v1645 = vunpack.c.l.b16 %v1459
      %v1646 = vunpack.c.h.b16 %v1459
      %v1647 = vunpack.c.l.b16 %v1460
      %v1648 = vunpack.c.h.b16 %v1460
      %v1649 = vunpack.c.l.b16 %v1461
      %v1650 = vunpack.c.h.b16 %v1461
      %v1651 = vunpack.c.l.b16 %v1462
      %v1652 = vunpack.c.h.b16 %v1462
      %v1653 = vunpack.c.l.b16 %v1463
      %v1654 = vunpack.c.h.b16 %v1463
      %v1655 = vunpack.c.l.b16 %v1464
      %v1656 = vunpack.c.h.b16 %v1464
      %v1657 = vunpack.c.l.b16 %v1465
      %v1658 = vunpack.c.h.b16 %v1465
      %v1659 = vunpack.c.l.b16 %v1466
      %v1660 = vunpack.c.h.b16 %v1466
      %v1661 = vunpack.c.l.b16 %v1467
      %v1662 = vunpack.c.h.b16 %v1467
      %v1663 = vunpack.c.l.b16 %v1468
      %v1664 = vunpack.c.h.b16 %v1468
      %v1665 = vunpack.c.l.b16 %v1469
      %v1666 = vunpack.c.h.b16 %v1469
      %v1667 = vunpack.c.l.b16 %v1470
      %v1668 = vunpack.c.h.b16 %v1470
      %v1669 = vunpack.c.l.b16 %v1471
      %v1670 = vunpack.c.h.b16 %v1471
      %v1671 = vunpack.c.l.b16 %v1472
      %v1672 = vunpack.c.h.b16 %v1472
      %v1673 = vunpack.c.l.b16 %v1473
      %v1674 = vunpack.c.h.b16 %v1473
      %v1675 = vunpack.c.l.b16 %v1474
      %v1676 = vunpack.c.h.b16 %v1474
      %v1677 = vunpack.c.l.b16 %v1475
      %v1678 = vunpack.c.h.b16 %v1475
      %v1679 = vunpack.c.l.b16 %v1476
      %v1680 = vunpack.c.h.b16 %v1476
      %v1681 = vpack.c.b16 %v1555, %v1553
      %v1682 = vpack.c.b16 %v1556, %v1554
      %v1683 = vpack.c.b16 %v1559, %v1557
      %v1684 = vpack.c.b16 %v1560, %v1558
      %v1685 = vpack.c.b16 %v1563, %v1561
      %v1686 = vpack.c.b16 %v1564, %v1562
      %v1687 = vpack.c.b16 %v1567, %v1565
      %v1688 = vpack.c.b16 %v1568, %v1566
      %v1689 = vpack.c.b16 %v1571, %v1569
      %v1690 = vpack.c.b16 %v1572, %v1570
      %v1691 = vpack.c.b16 %v1575, %v1573
      %v1692 = vpack.c.b16 %v1576, %v1574
      %v1693 = vpack.c.b16 %v1579, %v1577
      %v1694 = vpack.c.b16 %v1580, %v1578
      %v1695 = vpack.c.b16 %v1583, %v1581
      %v1696 = vpack.c.b16 %v1584, %v1582
      %v1697 = vpack.c.b16 %v1587, %v1585
      %v1698 = vpack.c.b16 %v1588, %v1586
      %v1699 = vpack.c.b16 %v1591, %v1589
      %v1700 = vpack.c.b16 %v1592, %v1590
      %v1701 = vpack.c.b16 %v1595, %v1593
      %v1702 = vpack.c.b16 %v1596, %v1594
      %v1703 = vpack.c.b16 %v1599, %v1597
      %v1704 = vpack.c.b16 %v1600, %v1598
      %v1705 = vpack.c.b16 %v1603, %v1601
      %v1706 = vpack.c.b16 %v1604, %v1602
      %v1707 = vpack.c.b16 %v1607, %v1605
      %v1708 = vpack.c.b16 %v1608, %v1606
      %v1709 = vpack.c.b16 %v1611, %v1609
      %v1710 = vpack.c.b16 %v1612, %v1610
      %v1711 = vpack.c.b16 %v1615, %v1613
      %v1712 = vpack.c.b16 %v1616, %v1614
      %v1713 = vpack.c.b16 %v1619, %v1617
      %v1714 = vpack.c.b16 %v1620, %v1618
      %v1715 = vpack.c.b16 %v1623, %v1621
      %v1716 = vpack.c.b16 %v1624, %v1622
      %v1717 = vpack.c.b16 %v1627, %v1625
      %v1718 = vpack.c.b16 %v1628, %v1626
      %v1719 = vpack.c.b16 %v1631, %v1629
      %v1720 = vpack.c.b16 %v1632, %v1630
      %v1721 = vpack.c.b16 %v1635, %v1633
      %v1722 = vpack.c.b16 %v1636, %v1634
      %v1723 = vpack.c.b16 %v1639, %v1637
      %v1724 = vpack.c.b16 %v1640, %v1638
      %v1725 = vpack.c.b16 %v1643, %v1641
      %v1726 = vpack.c.b16 %v1644, %v1642
      %v1727 = vpack.c.b16 %v1647, %v1645
      %v1728 = vpack.c.b16 %v1648, %v1646
      %v1729 = vpack.c.b16 %v1651, %v1649
      %v1730 = vpack.c.b16 %v1652, %v1650
      %v1731 = vpack.c.b16 %v1655, %v1653
      %v1732 = vpack.c.b16 %v1656, %v1654
      %v1733 = vpack.c.b16 %v1659, %v1657
      %v1734 = vpack.c.b16 %v1660, %v1658
      %v1735 = vpack.c.b16 %v1663, %v1661
      %v1736 = vpack.c.b16 %v1664, %v1662
      %v1737 = vpack.c.b16 %v1667, %v1665
      %v1738 = vpack.c.b16 %v1668, %v1666
      %v1739 = vpack.c.b16 %v1671, %v1669
      %v1740 = vpack.c.b16 %v1672, %v1670
      %v1741 = vpack.c.b16 %v1675, %v1673
      %v1742 = vpack.c.b16 %v1676, %v1674
      %v1743 = vpack.c.b16 %v1679, %v1677
      %v1744 = vpack.c.b16 %v1680, %v1678
      %1809 = vmatprep.subr.bf16.mxu0 %v1682
      %1810 = vmatpush1.bf16.msra.mxu0 %v1681
      %1811 = vmatprep.subr.bf16.mxu0 %v1684
      %1812 = vmatpush1.bf16.msra.mxu0 %v1683
      %1813 = vmatprep.subr.bf16.mxu0 %v1686
      %1814 = vmatpush1.bf16.msra.mxu0 %v1685
      %1815 = vmatprep.subr.bf16.mxu0 %v1688
      %1816 = vmatpush1.bf16.msra.mxu0 %v1687
      %1817 = vmatprep.subr.bf16.mxu0 %v1690
      %1818 = vmatpush1.bf16.msra.mxu0 %v1689
      %1819 = vmatprep.subr.bf16.mxu0 %v1692
      %1820 = vmatpush1.bf16.msra.mxu0 %v1691
      %1821 = vmatprep.subr.bf16.mxu0 %v1694
      %1822 = vmatpush1.bf16.msra.mxu0 %v1693
      %1823 = vmatprep.subr.bf16.mxu0 %v1696
      %1824 = vmatpush1.bf16.msra.mxu0 %v1695
      %1825 = vmatprep.subr.bf16.mxu0 %v1698
      %1826 = vmatpush1.bf16.msra.mxu0 %v1697
      %1827 = vmatprep.subr.bf16.mxu0 %v1700
      %1828 = vmatpush1.bf16.msra.mxu0 %v1699
      %1829 = vmatprep.subr.bf16.mxu0 %v1702
      %1830 = vmatpush1.bf16.msra.mxu0 %v1701
      %1831 = vmatprep.subr.bf16.mxu0 %v1704
      %1832 = vmatpush1.bf16.msra.mxu0 %v1703
      %1833 = vmatprep.subr.bf16.mxu0 %v1706
      %1834 = vmatpush1.bf16.msra.mxu0 %v1705
      %1835 = vmatprep.subr.bf16.mxu0 %v1708
      %1836 = vmatpush1.bf16.msra.mxu0 %v1707
      %1837 = vmatprep.subr.bf16.mxu0 %v1710
      %1838 = vmatpush1.bf16.msra.mxu0 %v1709
      %1839 = vmatprep.subr.bf16.mxu0 %v1712
      %1840 = vmatpush1.bf16.msra.mxu0 %v1711
      %1841 = vmatprep.mubr.bf16.mxu0 %v1410
      %1842 = vmatmul.mubr.bf16.gmra.mrb[0].mxu0 %v1409
      %v1843 = vpop.f32.mrb[0].mxu0
      %v1844 = vadd.f32 %v1482, %v1843
      %v1845 = vpop.f32.mrb[0].mxu0
      %v1846 = vadd.f32 %v1486, %v1845
      %v1847 = vpop.f32.mrb[0].mxu0
      %v1848 = vpop.f32.mrb[0].mxu0
      %1849 = vdwg.mxu0
      %1850 = vmatprep.subr.bf16.mxu0 %v1714
      %1851 = vmatpush1.bf16.msra.mxu0 %v1713
      %1852 = vmatprep.subr.bf16.mxu0 %v1716
      %1853 = vmatpush1.bf16.msra.mxu0 %v1715
      %1854 = vmatprep.subr.bf16.mxu0 %v1718
      %1855 = vmatpush1.bf16.msra.mxu0 %v1717
      %1856 = vmatprep.subr.bf16.mxu0 %v1720
      %1857 = vmatpush1.bf16.msra.mxu0 %v1719
      %1858 = vmatprep.subr.bf16.mxu0 %v1722
      %1859 = vmatpush1.bf16.msra.mxu0 %v1721
      %1860 = vmatprep.subr.bf16.mxu0 %v1724
      %1861 = vmatpush1.bf16.msra.mxu0 %v1723
      %1862 = vmatprep.subr.bf16.mxu0 %v1726
      %1863 = vmatpush1.bf16.msra.mxu0 %v1725
      %1864 = vmatprep.subr.bf16.mxu0 %v1728
      %1865 = vmatpush1.bf16.msra.mxu0 %v1727
      %1866 = vmatprep.subr.bf16.mxu0 %v1730
      %1867 = vmatpush1.bf16.msra.mxu0 %v1729
      %1868 = vmatprep.subr.bf16.mxu0 %v1732
      %1869 = vmatpush1.bf16.msra.mxu0 %v1731
      %1870 = vmatprep.subr.bf16.mxu0 %v1734
      %1871 = vmatpush1.bf16.msra.mxu0 %v1733
      %1872 = vmatprep.subr.bf16.mxu0 %v1736
      %1873 = vmatpush1.bf16.msra.mxu0 %v1735
      %1874 = vmatprep.subr.bf16.mxu0 %v1738
      %1875 = vmatpush1.bf16.msra.mxu0 %v1737
      %1876 = vmatprep.subr.bf16.mxu0 %v1740
      %1877 = vmatpush1.bf16.msra.mxu0 %v1739
      %1878 = vmatprep.subr.bf16.mxu0 %v1742
      %1879 = vmatpush1.bf16.msra.mxu0 %v1741
      %1880 = vmatprep.subr.bf16.mxu0 %v1744
      %1881 = vmatpush1.bf16.msra.mxu0 %v1743
      %1882 = vmatprep.mubr.bf16.mxu0 %v1412
      %1883 = vmatmul.mubr.bf16.gmra.mrb[0].mxu0 %v1411
      %v1884 = vpop.f32.mrb[0].mxu0
      %v1885 = vadd.f32 %v1844, %v1884
      %v1886 = vpop.f32.mrb[0].mxu0
      %v1887 = vadd.f32 %v1846, %v1886
      %v1888 = vpop.f32.mrb[0].mxu0
      %v1889 = vpop.f32.mrb[0].mxu0
      %1890 = vdwg.mxu0
      %v1891 = vmax.f32 %v1885, 0.0
      %v1892 = vmax.f32 %v1887, 0.0
      %v1895 = vcombine.low %v1891, %v1892
      %1897 = vst [vmem:[%s480] sm:$0xff] %v1895
      %p1898 = scmp.lt.s32.totalorder %s24, 1
      %s1899 = scalar_select %p1898, %s24, 1
      %s1900 = smul.addr %s1899, 2
      %s1901 = smul.addr %s1900, 4
      %s1902 = scalar_lea.vmem %s13, %s1901
      // Predicated region
      $region73: #{attention_forward.1} parent=71 // pred_check
        %p1903 = pneg %p330
      $region74: #{attention_forward.1} parent=71 // pred_check_branch
        %1905 = sbr.rel (%p1903) target = $region76
      $region75: #{attention_forward.1} parent=71 // pred_region
        _
      $region76: #{attention_forward.1} parent=71 // pred_fallthru
        _
    $region72: #{attention_forward.1} parent=5 // pred_fallthru
      _
    %p1906 = scmp.le.s32.totalorder 2, %s19
    // Predicated region
    $region77: #{attention_forward.1} parent=5 // pred_check
      %p1907 = pneg %p1906
    $region78: #{attention_forward.1} parent=5 // pred_check_branch
      %1909 = sbr.rel (%p1907) target = $region80
    $region79: #{attention_forward.1} parent=5 // pred_region
      %s1910 = ssub.s32 %s19, 2
      // Predicated region
      $region81: #{attention_forward.1} parent=79 // pred_check
        %p1911 = pneg %p336
      $region82: #{attention_forward.1} parent=79 // pred_check_branch
        %1913 = sbr.rel (%p1911) target = $region84
      $region83: #{attention_forward.1} parent=79 // pred_region
        %p1914 = scmp.lt.s32.totalorder %s25, 1
        %s1915 = scalar_select %p1914, %s25, 1
        %s1916 = smul.addr %s1915, 2
        %s1917 = smul.addr %s1916, 4
        %s1918 = scalar_lea.vmem %s13, %s1917
      $region84: #{attention_forward.1} parent=79 // pred_fallthru
        _
    $region80: #{attention_forward.1} parent=5 // pred_fallthru
      _
  $region6: #{attention_forward.1} parent=0 // loop_footer
    %s23 = sadd.s32 1, %s19
  $region7: #{attention_forward.1} parent=0 // loop_footer_branch
    %18 = sbr.rel target = $region3
  $region8: #{attention_forward.1} parent=0 // loop_exit
    _

</llo_original>
